<compile_context>
chip_gen: v7x
topology: tpu7x:2x2x1
jax: 0.10.0
libtpu: 0.0.40
codegen_flags: <defaults>
</compile_context>

<pallas_src>
import math

import jax
import jax.numpy as jnp
from jax import lax
from jax.experimental import pallas as pl
from jax.experimental.pallas import tpu as pltpu

HID_DIM = 32
N_HEADS = 4
HEAD_DIM = HID_DIM // N_HEADS
BATCH = 2
SEQ = 8

INV_SCALE = 1.0 / math.sqrt(HEAD_DIM)

OUT_COLS = BATCH * HID_DIM          # 64 packed lanes for the projected output
ATTN_COLS = BATCH * N_HEADS * SEQ   # 64 packed lanes for attention probabilities
PACK_W = OUT_COLS + ATTN_COLS       # 128 -> one full (8,128) vreg, no HBM padding

# dot_general dims: contract the last axis of both operands (A @ B.T, no transpose)
_TRANS_B = (((1,), (1,)), ((), ()))


def mha_kernel(q_ref, k_ref, v_ref,
               wqt_ref, bq_ref, wkt_ref, bk_ref,
               wvt_ref, bv_ref, wot_ref, bo_ref,
               out_ref):
    # Inputs are flattened (B*S, H) slabs; weights arrive pre-transposed to
    # (in, out), so the projections are plain x @ W with no in-kernel transposes.
    Q = jnp.dot(q_ref[...], wqt_ref[...], preferred_element_type=jnp.float32) + bq_ref[...]
    K = jnp.dot(k_ref[...], wkt_ref[...], preferred_element_type=jnp.float32) + bk_ref[...]
    V = jnp.dot(v_ref[...], wvt_ref[...], preferred_element_type=jnp.float32) + bv_ref[...]

    # Attention must stay per-batch; B and N_HEADS are tiny -> static unroll.
    ctx_rows = []
    for b in range(BATCH):
        r0 = b * SEQ
        head_parts = []
        for h in range(N_HEADS):
            c0 = h * HEAD_DIM
            Qh = Q[r0:r0 + SEQ, c0:c0 + HEAD_DIM]          # (S, hd)
            Kh = K[r0:r0 + SEQ, c0:c0 + HEAD_DIM]
            Vh = V[r0:r0 + SEQ, c0:c0 + HEAD_DIM]

            # Qh @ Kh^T on the MXU without a materialized transpose.
            energy = lax.dot_general(Qh, Kh, _TRANS_B,
                                     preferred_element_type=jnp.float32) * INV_SCALE
            # TODO(synk): mask=None path only; nn.Dropout is identity in eval mode.
            m = jnp.max(energy, axis=-1, keepdims=True)
            p = jnp.exp(energy - m)
            s = jnp.sum(p, axis=-1, keepdims=True)
            r = pl.reciprocal(s, approx=True)              # EUP slot (free here)
            r = r * (2.0 - s * r)                          # one Newton step -> f32 accuracy
            attn = p * r                                   # (S, S)

            # Lane-dense packed store of the attention probabilities.
            a0 = OUT_COLS + (b * N_HEADS + h) * SEQ
            out_ref[:, a0:a0 + SEQ] = attn

            head_parts.append(jnp.dot(attn, Vh, preferred_element_type=jnp.float32))
        ctx_rows.append(jnp.concatenate(head_parts, axis=-1))   # (S, H)

    # Output projection on the full (B*S, H) slab in a single matmul.
    ctx_all = jnp.concatenate(ctx_rows, axis=0)                 # (B*S, H)
    out_all = jnp.dot(ctx_all, wot_ref[...],
                      preferred_element_type=jnp.float32) + bo_ref[...]
    for b in range(BATCH):
        out_ref[:, b * HID_DIM:(b + 1) * HID_DIM] = out_all[b * SEQ:(b + 1) * SEQ, :]


def mha_forward(query, key, value, params):
    B, S, H = query.shape
    wq, bq, wk, bk, wv, bv, wo, bo = params

    # Layout plumbing in the wrapper (constants / cheap XLA ops, not in-kernel):
    #   * fold batch into the sublane axis
    #   * pre-transpose nn.Linear weights (out,in) -> (in,out)
    q2 = query.reshape(B * S, H)
    k2 = key.reshape(B * S, H)
    v2 = value.reshape(B * S, H)
    wqt, wkt, wvt, wot = wq.T, wk.T, wv.T, wo.T

    x_spec = pl.BlockSpec((B * S, H), lambda i: (0, 0))
    w_spec = pl.BlockSpec((H, H), lambda i: (0, 0))
    b_spec = pl.BlockSpec((1, H), lambda i: (0, 0))

    packed = pl.pallas_call(
        mha_kernel,
        out_shape=jax.ShapeDtypeStruct((S, PACK_W), jnp.float32),
        grid=(1,),   # whole problem in one step: pipeline overhead paid once
        in_specs=[x_spec, x_spec, x_spec,
                  w_spec, b_spec, w_spec, b_spec,
                  w_spec, b_spec, w_spec, b_spec],
        out_specs=pl.BlockSpec((S, PACK_W), lambda i: (0, 0)),
        compiler_params=pltpu.CompilerParams(dimension_semantics=("arbitrary",)),
    )(q2, k2, v2, wqt, bq, wkt, bk, wvt, bv, wot, bo)

    # Unpack the lane-dense (S, 128) slab back to the module's output layouts.
    out = packed[:, :OUT_COLS].reshape(S, B, H).transpose(1, 0, 2)                 # (B, S, H)
    attn = packed[:, OUT_COLS:].reshape(S, B, N_HEADS, S).transpose(1, 2, 0, 3)    # (B, nH, S, S)
    return out, attn


def mha_reference(query, key, value, params):
    """Pure-JAX reference matching the PyTorch forward (mask=None, eval mode)."""
    wq, bq, wk, bk, wv, bv, wo, bo = params
    B, S, H = query.shape

    def lin(x, w, b):
        return jnp.einsum("bsh,oh->bso", x, w) + b[0]

    Q = lin(query, wq, bq).reshape(B, S, N_HEADS, HEAD_DIM).transpose(0, 2, 1, 3)
    K = lin(key, wk, bk).reshape(B, S, N_HEADS, HEAD_DIM).transpose(0, 2, 1, 3)
    V = lin(value, wv, bv).reshape(B, S, N_HEADS, HEAD_DIM).transpose(0, 2, 1, 3)
    energy = jnp.einsum("bhqd,bhkd->bhqk", Q, K) / jnp.sqrt(jnp.float32(HEAD_DIM))
    attention = jax.nn.softmax(energy, axis=-1)
    x = jnp.einsum("bhqk,bhkd->bhqd", attention, V)
    x = x.transpose(0, 2, 1, 3).reshape(B, S, H)
    x = jnp.einsum("bsh,oh->bso", x, wo) + bo[0]
    return x, attention


def init_params(key, hid_dim):
    """Deterministic nn.Linear-style init (uniform(-1/sqrt(fan_in), 1/sqrt(fan_in)))."""
    bound = 1.0 / jnp.sqrt(jnp.float32(hid_dim))
    keys = jax.random.split(key, 8)
    params = []
    for i in range(4):
        w = jax.random.uniform(keys[2 * i], (hid_dim, hid_dim), jnp.float32, -bound, bound)
        b = jax.random.uniform(keys[2 * i + 1], (1, hid_dim), jnp.float32, -bound, bound)
        params += [w, b]
    return tuple(params)


if __name__ == "__main__":
    root = jax.random.PRNGKey(0)
    k_q, k_k, k_v, k_p = jax.random.split(root, 4)

    query = jax.random.normal(k_q, (BATCH, SEQ, HID_DIM), jnp.float32)
    key = jax.random.normal(k_k, (BATCH, SEQ, HID_DIM), jnp.float32)
    value = jax.random.normal(k_v, (BATCH, SEQ, HID_DIM), jnp.float32)
    params = init_params(k_p, HID_DIM)

    out, attn = mha_forward(query, key, value, params)
    out = jax.block_until_ready(out)
    attn = jax.block_until_ready(attn)

    ref_out, ref_attn = mha_reference(query, key, value, params)
    assert out.shape == (BATCH, SEQ, HID_DIM)
    assert attn.shape == (BATCH, N_HEADS, SEQ, SEQ)
    # Tolerance 1e-4: EUP approx reciprocal + Newton step is ~1e-7 off exact divide.
    assert jnp.allclose(out, ref_out, atol=1e-4, rtol=1e-4)
    assert jnp.allclose(attn, ref_attn, atol=1e-4, rtol=1e-4)

    print("KERNEL_OK")
</pallas_src>

<mosaic_0001>
module attributes {stable_mosaic.version = 11 : i64} {
  func.func @mha_kernel(%arg0: i32, %arg1: memref<16x32xf32, #tpu.memory_space<vmem>>, %arg2: memref<16x32xf32, #tpu.memory_space<vmem>>, %arg3: memref<16x32xf32, #tpu.memory_space<vmem>>, %arg4: memref<32x32xf32, #tpu.memory_space<vmem>>, %arg5: memref<1x32xf32, #tpu.memory_space<vmem>>, %arg6: memref<32x32xf32, #tpu.memory_space<vmem>>, %arg7: memref<1x32xf32, #tpu.memory_space<vmem>>, %arg8: memref<32x32xf32, #tpu.memory_space<vmem>>, %arg9: memref<1x32xf32, #tpu.memory_space<vmem>>, %arg10: memref<32x32xf32, #tpu.memory_space<vmem>>, %arg11: memref<1x32xf32, #tpu.memory_space<vmem>>, %arg12: memref<8x128xf32, #tpu.memory_space<vmem>>) attributes {dimension_semantics = [#tpu.dimension_semantics<arbitrary>], iteration_bounds = array<i64: 1>, scalar_prefetch = 0 : i64, scratch_operands = 0 : i64, tpu.core_type = #tpu.core_type<tc>, window_params = [{pipeline_mode = #tpu.pipeline_mode<synchronous>, transform_indices = @transform_0, window_bounds = array<i64: 16, 32>}, {pipeline_mode = #tpu.pipeline_mode<synchronous>, transform_indices = @transform_1, window_bounds = array<i64: 16, 32>}, {pipeline_mode = #tpu.pipeline_mode<synchronous>, transform_indices = @transform_2, window_bounds = array<i64: 16, 32>}, {pipeline_mode = #tpu.pipeline_mode<synchronous>, transform_indices = @transform_3, window_bounds = array<i64: 32, 32>}, {pipeline_mode = #tpu.pipeline_mode<synchronous>, transform_indices = @transform_4, window_bounds = array<i64: 1, 32>}, {pipeline_mode = #tpu.pipeline_mode<synchronous>, transform_indices = @transform_5, window_bounds = array<i64: 32, 32>}, {pipeline_mode = #tpu.pipeline_mode<synchronous>, transform_indices = @transform_6, window_bounds = array<i64: 1, 32>}, {pipeline_mode = #tpu.pipeline_mode<synchronous>, transform_indices = @transform_7, window_bounds = array<i64: 32, 32>}, {pipeline_mode = #tpu.pipeline_mode<synchronous>, transform_indices = @transform_8, window_bounds = array<i64: 1, 32>}, {pipeline_mode = #tpu.pipeline_mode<synchronous>, transform_indices = @transform_9, window_bounds = array<i64: 32, 32>}, {pipeline_mode = #tpu.pipeline_mode<synchronous>, transform_indices = @transform_10, window_bounds = array<i64: 1, 32>}, {pipeline_mode = #tpu.pipeline_mode<synchronous>, transform_indices = @transform_11, window_bounds = array<i64: 8, 128>}]} {
    %c0 = arith.constant 0 : index
    %c0_0 = arith.constant 0 : index
    %0 = vector.load %arg1[%c0, %c0_0] : memref<16x32xf32, #tpu.memory_space<vmem>>, vector<16x32xf32>
    %c0_1 = arith.constant 0 : index
    %c0_2 = arith.constant 0 : index
    %1 = vector.load %arg4[%c0_1, %c0_2] : memref<32x32xf32, #tpu.memory_space<vmem>>, vector<32x32xf32>
    %cst = arith.constant dense<0.000000e+00> : vector<16x32xf32>
    %2 = tpu.matmul %0, %1, %cst {dimension_numbers = #tpu.dot_dimension_numbers<[1], [0], [0], [1], [0, 0, 1, 1], [], []>} : vector<16x32xf32>, vector<32x32xf32>, vector<16x32xf32> -> vector<16x32xf32>
    %c0_3 = arith.constant 0 : index
    %c0_4 = arith.constant 0 : index
    %3 = vector.load %arg5[%c0_3, %c0_4] : memref<1x32xf32, #tpu.memory_space<vmem>>, vector<1x32xf32>
    %4 = vector.broadcast %3 : vector<1x32xf32> to vector<16x32xf32>
    %5 = arith.addf %2, %4 : vector<16x32xf32>
    %c0_5 = arith.constant 0 : index
    %c0_6 = arith.constant 0 : index
    %6 = vector.load %arg2[%c0_5, %c0_6] : memref<16x32xf32, #tpu.memory_space<vmem>>, vector<16x32xf32>
    %c0_7 = arith.constant 0 : index
    %c0_8 = arith.constant 0 : index
    %7 = vector.load %arg6[%c0_7, %c0_8] : memref<32x32xf32, #tpu.memory_space<vmem>>, vector<32x32xf32>
    %cst_9 = arith.constant dense<0.000000e+00> : vector<16x32xf32>
    %8 = tpu.matmul %6, %7, %cst_9 {dimension_numbers = #tpu.dot_dimension_numbers<[1], [0], [0], [1], [0, 0, 1, 1], [], []>} : vector<16x32xf32>, vector<32x32xf32>, vector<16x32xf32> -> vector<16x32xf32>
    %c0_10 = arith.constant 0 : index
    %c0_11 = arith.constant 0 : index
    %9 = vector.load %arg7[%c0_10, %c0_11] : memref<1x32xf32, #tpu.memory_space<vmem>>, vector<1x32xf32>
    %10 = vector.broadcast %9 : vector<1x32xf32> to vector<16x32xf32>
    %11 = arith.addf %8, %10 : vector<16x32xf32>
    %c0_12 = arith.constant 0 : index
    %c0_13 = arith.constant 0 : index
    %12 = vector.load %arg3[%c0_12, %c0_13] : memref<16x32xf32, #tpu.memory_space<vmem>>, vector<16x32xf32>
    %c0_14 = arith.constant 0 : index
    %c0_15 = arith.constant 0 : index
    %13 = vector.load %arg8[%c0_14, %c0_15] : memref<32x32xf32, #tpu.memory_space<vmem>>, vector<32x32xf32>
    %cst_16 = arith.constant dense<0.000000e+00> : vector<16x32xf32>
    %14 = tpu.matmul %12, %13, %cst_16 {dimension_numbers = #tpu.dot_dimension_numbers<[1], [0], [0], [1], [0, 0, 1, 1], [], []>} : vector<16x32xf32>, vector<32x32xf32>, vector<16x32xf32> -> vector<16x32xf32>
    %c0_17 = arith.constant 0 : index
    %c0_18 = arith.constant 0 : index
    %15 = vector.load %arg9[%c0_17, %c0_18] : memref<1x32xf32, #tpu.memory_space<vmem>>, vector<1x32xf32>
    %16 = vector.broadcast %15 : vector<1x32xf32> to vector<16x32xf32>
    %17 = arith.addf %14, %16 : vector<16x32xf32>
    %18 = vector.extract_strided_slice %5 {offsets = [0, 0], sizes = [8, 8], strides = [1, 1]} : vector<16x32xf32> to vector<8x8xf32>
    %19 = vector.extract_strided_slice %11 {offsets = [0, 0], sizes = [8, 8], strides = [1, 1]} : vector<16x32xf32> to vector<8x8xf32>
    %20 = vector.extract_strided_slice %17 {offsets = [0, 0], sizes = [8, 8], strides = [1, 1]} : vector<16x32xf32> to vector<8x8xf32>
    %cst_19 = arith.constant dense<0.000000e+00> : vector<8x8xf32>
    %21 = tpu.matmul %18, %19, %cst_19 {dimension_numbers = #tpu.dot_dimension_numbers<[1], [1], [0], [0], [0, 0, 1, 0], [], []>} : vector<8x8xf32>, vector<8x8xf32>, vector<8x8xf32> -> vector<8x8xf32>
    %cst_20 = arith.constant 0.353553385 : f32
    %22 = vector.broadcast %cst_20 : f32 to vector<8x8xf32>
    %23 = arith.mulf %21, %22 : vector<8x8xf32>
    %cst_21 = arith.constant dense<0xFF800000> : vector<8xf32>
    %24 = vector.multi_reduction <maximumf>, %23, %cst_21 [1] : vector<8x8xf32> to vector<8xf32>
    %25 = vector.shape_cast %24 : vector<8xf32> to vector<8x1xf32>
    %26 = vector.broadcast %25 : vector<8x1xf32> to vector<8x8xf32>
    %27 = arith.subf %23, %26 : vector<8x8xf32>
    %28 = math.exp %27 : vector<8x8xf32>
    %cst_22 = arith.constant dense<0.000000e+00> : vector<8xf32>
    %29 = vector.multi_reduction <add>, %28, %cst_22 [1] : vector<8x8xf32> to vector<8xf32>
    %30 = vector.shape_cast %29 : vector<8xf32> to vector<8x1xf32>
    %31 = tpu.reciprocal %30 {approx = true} : vector<8x1xf32> -> vector<8x1xf32>
    %32 = arith.mulf %30, %31 : vector<8x1xf32>
    %cst_23 = arith.constant 2.000000e+00 : f32
    %33 = vector.broadcast %cst_23 : f32 to vector<8x1xf32>
    %34 = arith.subf %33, %32 : vector<8x1xf32>
    %35 = arith.mulf %31, %34 : vector<8x1xf32>
    %36 = vector.broadcast %35 : vector<8x1xf32> to vector<8x8xf32>
    %37 = arith.mulf %28, %36 : vector<8x8xf32>
    %c0_24 = arith.constant 0 : index
    %c64 = arith.constant 64 : index
    %38 = vector.load %arg12[%c0_24, %c64] : memref<8x128xf32, #tpu.memory_space<vmem>>, vector<8x8xf32>
    tpu.vector_store %arg12[%c0_24, %c64], %37 {strides = array<i32>} : memref<8x128xf32, #tpu.memory_space<vmem>>, vector<8x8xf32>,
    %cst_25 = arith.constant dense<0.000000e+00> : vector<8x8xf32>
    %39 = tpu.matmul %37, %20, %cst_25 {dimension_numbers = #tpu.dot_dimension_numbers<[1], [0], [0], [1], [0, 0, 1, 1], [], []>} : vector<8x8xf32>, vector<8x8xf32>, vector<8x8xf32> -> vector<8x8xf32>
    %40 = vector.extract_strided_slice %5 {offsets = [0, 8], sizes = [8, 8], strides = [1, 1]} : vector<16x32xf32> to vector<8x8xf32>
    %41 = vector.extract_strided_slice %11 {offsets = [0, 8], sizes = [8, 8], strides = [1, 1]} : vector<16x32xf32> to vector<8x8xf32>
    %42 = vector.extract_strided_slice %17 {offsets = [0, 8], sizes = [8, 8], strides = [1, 1]} : vector<16x32xf32> to vector<8x8xf32>
    %cst_26 = arith.constant dense<0.000000e+00> : vector<8x8xf32>
    %43 = tpu.matmul %40, %41, %cst_26 {dimension_numbers = #tpu.dot_dimension_numbers<[1], [1], [0], [0], [0, 0, 1, 0], [], []>} : vector<8x8xf32>, vector<8x8xf32>, vector<8x8xf32> -> vector<8x8xf32>
    %cst_27 = arith.constant 0.353553385 : f32
    %44 = vector.broadcast %cst_27 : f32 to vector<8x8xf32>
    %45 = arith.mulf %43, %44 : vector<8x8xf32>
    %cst_28 = arith.constant dense<0xFF800000> : vector<8xf32>
    %46 = vector.multi_reduction <maximumf>, %45, %cst_28 [1] : vector<8x8xf32> to vector<8xf32>
    %47 = vector.shape_cast %46 : vector<8xf32> to vector<8x1xf32>
    %48 = vector.broadcast %47 : vector<8x1xf32> to vector<8x8xf32>
    %49 = arith.subf %45, %48 : vector<8x8xf32>
    %50 = math.exp %49 : vector<8x8xf32>
    %cst_29 = arith.constant dense<0.000000e+00> : vector<8xf32>
    %51 = vector.multi_reduction <add>, %50, %cst_29 [1] : vector<8x8xf32> to vector<8xf32>
    %52 = vector.shape_cast %51 : vector<8xf32> to vector<8x1xf32>
    %53 = tpu.reciprocal %52 {approx = true} : vector<8x1xf32> -> vector<8x1xf32>
    %54 = arith.mulf %52, %53 : vector<8x1xf32>
    %cst_30 = arith.constant 2.000000e+00 : f32
    %55 = vector.broadcast %cst_30 : f32 to vector<8x1xf32>
    %56 = arith.subf %55, %54 : vector<8x1xf32>
    %57 = arith.mulf %53, %56 : vector<8x1xf32>
    %58 = vector.broadcast %57 : vector<8x1xf32> to vector<8x8xf32>
    %59 = arith.mulf %50, %58 : vector<8x8xf32>
    %c0_31 = arith.constant 0 : index
    %c72 = arith.constant 72 : index
    %60 = vector.load %arg12[%c0_31, %c72] : memref<8x128xf32, #tpu.memory_space<vmem>>, vector<8x8xf32>
    tpu.vector_store %arg12[%c0_31, %c72], %59 {strides = array<i32>} : memref<8x128xf32, #tpu.memory_space<vmem>>, vector<8x8xf32>,
    %cst_32 = arith.constant dense<0.000000e+00> : vector<8x8xf32>
    %61 = tpu.matmul %59, %42, %cst_32 {dimension_numbers = #tpu.dot_dimension_numbers<[1], [0], [0], [1], [0, 0, 1, 1], [], []>} : vector<8x8xf32>, vector<8x8xf32>, vector<8x8xf32> -> vector<8x8xf32>
    %62 = vector.extract_strided_slice %5 {offsets = [0, 16], sizes = [8, 8], strides = [1, 1]} : vector<16x32xf32> to vector<8x8xf32>
    %63 = vector.extract_strided_slice %11 {offsets = [0, 16], sizes = [8, 8], strides = [1, 1]} : vector<16x32xf32> to vector<8x8xf32>
    %64 = vector.extract_strided_slice %17 {offsets = [0, 16], sizes = [8, 8], strides = [1, 1]} : vector<16x32xf32> to vector<8x8xf32>
    %cst_33 = arith.constant dense<0.000000e+00> : vector<8x8xf32>
    %65 = tpu.matmul %62, %63, %cst_33 {dimension_numbers = #tpu.dot_dimension_numbers<[1], [1], [0], [0], [0, 0, 1, 0], [], []>} : vector<8x8xf32>, vector<8x8xf32>, vector<8x8xf32> -> vector<8x8xf32>
    %cst_34 = arith.constant 0.353553385 : f32
    %66 = vector.broadcast %cst_34 : f32 to vector<8x8xf32>
    %67 = arith.mulf %65, %66 : vector<8x8xf32>
    %cst_35 = arith.constant dense<0xFF800000> : vector<8xf32>
    %68 = vector.multi_reduction <maximumf>, %67, %cst_35 [1] : vector<8x8xf32> to vector<8xf32>
    %69 = vector.shape_cast %68 : vector<8xf32> to vector<8x1xf32>
    %70 = vector.broadcast %69 : vector<8x1xf32> to vector<8x8xf32>
    %71 = arith.subf %67, %70 : vector<8x8xf32>
    %72 = math.exp %71 : vector<8x8xf32>
    %cst_36 = arith.constant dense<0.000000e+00> : vector<8xf32>
    %73 = vector.multi_reduction <add>, %72, %cst_36 [1] : vector<8x8xf32> to vector<8xf32>
    %74 = vector.shape_cast %73 : vector<8xf32> to vector<8x1xf32>
    %75 = tpu.reciprocal %74 {approx = true} : vector<8x1xf32> -> vector<8x1xf32>
    %76 = arith.mulf %74, %75 : vector<8x1xf32>
    %cst_37 = arith.constant 2.000000e+00 : f32
    %77 = vector.broadcast %cst_37 : f32 to vector<8x1xf32>
    %78 = arith.subf %77, %76 : vector<8x1xf32>
    %79 = arith.mulf %75, %78 : vector<8x1xf32>
    %80 = vector.broadcast %79 : vector<8x1xf32> to vector<8x8xf32>
    %81 = arith.mulf %72, %80 : vector<8x8xf32>
    %c0_38 = arith.constant 0 : index
    %c80 = arith.constant 80 : index
    %82 = vector.load %arg12[%c0_38, %c80] : memref<8x128xf32, #tpu.memory_space<vmem>>, vector<8x8xf32>
    tpu.vector_store %arg12[%c0_38, %c80], %81 {strides = array<i32>} : memref<8x128xf32, #tpu.memory_space<vmem>>, vector<8x8xf32>,
    %cst_39 = arith.constant dense<0.000000e+00> : vector<8x8xf32>
    %83 = tpu.matmul %81, %64, %cst_39 {dimension_numbers = #tpu.dot_dimension_numbers<[1], [0], [0], [1], [0, 0, 1, 1], [], []>} : vector<8x8xf32>, vector<8x8xf32>, vector<8x8xf32> -> vector<8x8xf32>
    %84 = vector.extract_strided_slice %5 {offsets = [0, 24], sizes = [8, 8], strides = [1, 1]} : vector<16x32xf32> to vector<8x8xf32>
    %85 = vector.extract_strided_slice %11 {offsets = [0, 24], sizes = [8, 8], strides = [1, 1]} : vector<16x32xf32> to vector<8x8xf32>
    %86 = vector.extract_strided_slice %17 {offsets = [0, 24], sizes = [8, 8], strides = [1, 1]} : vector<16x32xf32> to vector<8x8xf32>
    %cst_40 = arith.constant dense<0.000000e+00> : vector<8x8xf32>
    %87 = tpu.matmul %84, %85, %cst_40 {dimension_numbers = #tpu.dot_dimension_numbers<[1], [1], [0], [0], [0, 0, 1, 0], [], []>} : vector<8x8xf32>, vector<8x8xf32>, vector<8x8xf32> -> vector<8x8xf32>
    %cst_41 = arith.constant 0.353553385 : f32
    %88 = vector.broadcast %cst_41 : f32 to vector<8x8xf32>
    %89 = arith.mulf %87, %88 : vector<8x8xf32>
    %cst_42 = arith.constant dense<0xFF800000> : vector<8xf32>
    %90 = vector.multi_reduction <maximumf>, %89, %cst_42 [1] : vector<8x8xf32> to vector<8xf32>
    %91 = vector.shape_cast %90 : vector<8xf32> to vector<8x1xf32>
    %92 = vector.broadcast %91 : vector<8x1xf32> to vector<8x8xf32>
    %93 = arith.subf %89, %92 : vector<8x8xf32>
    %94 = math.exp %93 : vector<8x8xf32>
    %cst_43 = arith.constant dense<0.000000e+00> : vector<8xf32>
    %95 = vector.multi_reduction <add>, %94, %cst_43 [1] : vector<8x8xf32> to vector<8xf32>
    %96 = vector.shape_cast %95 : vector<8xf32> to vector<8x1xf32>
    %97 = tpu.reciprocal %96 {approx = true} : vector<8x1xf32> -> vector<8x1xf32>
    %98 = arith.mulf %96, %97 : vector<8x1xf32>
    %cst_44 = arith.constant 2.000000e+00 : f32
    %99 = vector.broadcast %cst_44 : f32 to vector<8x1xf32>
    %100 = arith.subf %99, %98 : vector<8x1xf32>
    %101 = arith.mulf %97, %100 : vector<8x1xf32>
    %102 = vector.broadcast %101 : vector<8x1xf32> to vector<8x8xf32>
    %103 = arith.mulf %94, %102 : vector<8x8xf32>
    %c0_45 = arith.constant 0 : index
    %c88 = arith.constant 88 : index
    %104 = vector.load %arg12[%c0_45, %c88] : memref<8x128xf32, #tpu.memory_space<vmem>>, vector<8x8xf32>
    tpu.vector_store %arg12[%c0_45, %c88], %103 {strides = array<i32>} : memref<8x128xf32, #tpu.memory_space<vmem>>, vector<8x8xf32>,
    %cst_46 = arith.constant dense<0.000000e+00> : vector<8x8xf32>
    %105 = tpu.matmul %103, %86, %cst_46 {dimension_numbers = #tpu.dot_dimension_numbers<[1], [0], [0], [1], [0, 0, 1, 1], [], []>} : vector<8x8xf32>, vector<8x8xf32>, vector<8x8xf32> -> vector<8x8xf32>
    %106 = tpu.concatenate %39, %61, %83, %105 in 1 : vector<8x8xf32>, vector<8x8xf32>, vector<8x8xf32>, vector<8x8xf32> -> vector<8x32xf32>
    %107 = vector.extract_strided_slice %5 {offsets = [8, 0], sizes = [8, 8], strides = [1, 1]} : vector<16x32xf32> to vector<8x8xf32>
    %108 = vector.extract_strided_slice %11 {offsets = [8, 0], sizes = [8, 8], strides = [1, 1]} : vector<16x32xf32> to vector<8x8xf32>
    %109 = vector.extract_strided_slice %17 {offsets = [8, 0], sizes = [8, 8], strides = [1, 1]} : vector<16x32xf32> to vector<8x8xf32>
    %cst_47 = arith.constant dense<0.000000e+00> : vector<8x8xf32>
    %110 = tpu.matmul %107, %108, %cst_47 {dimension_numbers = #tpu.dot_dimension_numbers<[1], [1], [0], [0], [0, 0, 1, 0], [], []>} : vector<8x8xf32>, vector<8x8xf32>, vector<8x8xf32> -> vector<8x8xf32>
    %cst_48 = arith.constant 0.353553385 : f32
    %111 = vector.broadcast %cst_48 : f32 to vector<8x8xf32>
    %112 = arith.mulf %110, %111 : vector<8x8xf32>
    %cst_49 = arith.constant dense<0xFF800000> : vector<8xf32>
    %113 = vector.multi_reduction <maximumf>, %112, %cst_49 [1] : vector<8x8xf32> to vector<8xf32>
    %114 = vector.shape_cast %113 : vector<8xf32> to vector<8x1xf32>
    %115 = vector.broadcast %114 : vector<8x1xf32> to vector<8x8xf32>
    %116 = arith.subf %112, %115 : vector<8x8xf32>
    %117 = math.exp %116 : vector<8x8xf32>
    %cst_50 = arith.constant dense<0.000000e+00> : vector<8xf32>
    %118 = vector.multi_reduction <add>, %117, %cst_50 [1] : vector<8x8xf32> to vector<8xf32>
    %119 = vector.shape_cast %118 : vector<8xf32> to vector<8x1xf32>
    %120 = tpu.reciprocal %119 {approx = true} : vector<8x1xf32> -> vector<8x1xf32>
    %121 = arith.mulf %119, %120 : vector<8x1xf32>
    %cst_51 = arith.constant 2.000000e+00 : f32
    %122 = vector.broadcast %cst_51 : f32 to vector<8x1xf32>
    %123 = arith.subf %122, %121 : vector<8x1xf32>
    %124 = arith.mulf %120, %123 : vector<8x1xf32>
    %125 = vector.broadcast %124 : vector<8x1xf32> to vector<8x8xf32>
    %126 = arith.mulf %117, %125 : vector<8x8xf32>
    %c0_52 = arith.constant 0 : index
    %c96 = arith.constant 96 : index
    %127 = vector.load %arg12[%c0_52, %c96] : memref<8x128xf32, #tpu.memory_space<vmem>>, vector<8x8xf32>
    tpu.vector_store %arg12[%c0_52, %c96], %126 {strides = array<i32>} : memref<8x128xf32, #tpu.memory_space<vmem>>, vector<8x8xf32>,
    %cst_53 = arith.constant dense<0.000000e+00> : vector<8x8xf32>
    %128 = tpu.matmul %126, %109, %cst_53 {dimension_numbers = #tpu.dot_dimension_numbers<[1], [0], [0], [1], [0, 0, 1, 1], [], []>} : vector<8x8xf32>, vector<8x8xf32>, vector<8x8xf32> -> vector<8x8xf32>
    %129 = vector.extract_strided_slice %5 {offsets = [8, 8], sizes = [8, 8], strides = [1, 1]} : vector<16x32xf32> to vector<8x8xf32>
    %130 = vector.extract_strided_slice %11 {offsets = [8, 8], sizes = [8, 8], strides = [1, 1]} : vector<16x32xf32> to vector<8x8xf32>
    %131 = vector.extract_strided_slice %17 {offsets = [8, 8], sizes = [8, 8], strides = [1, 1]} : vector<16x32xf32> to vector<8x8xf32>
    %cst_54 = arith.constant dense<0.000000e+00> : vector<8x8xf32>
    %132 = tpu.matmul %129, %130, %cst_54 {dimension_numbers = #tpu.dot_dimension_numbers<[1], [1], [0], [0], [0, 0, 1, 0], [], []>} : vector<8x8xf32>, vector<8x8xf32>, vector<8x8xf32> -> vector<8x8xf32>
    %cst_55 = arith.constant 0.353553385 : f32
    %133 = vector.broadcast %cst_55 : f32 to vector<8x8xf32>
    %134 = arith.mulf %132, %133 : vector<8x8xf32>
    %cst_56 = arith.constant dense<0xFF800000> : vector<8xf32>
    %135 = vector.multi_reduction <maximumf>, %134, %cst_56 [1] : vector<8x8xf32> to vector<8xf32>
    %136 = vector.shape_cast %135 : vector<8xf32> to vector<8x1xf32>
    %137 = vector.broadcast %136 : vector<8x1xf32> to vector<8x8xf32>
    %138 = arith.subf %134, %137 : vector<8x8xf32>
    %139 = math.exp %138 : vector<8x8xf32>
    %cst_57 = arith.constant dense<0.000000e+00> : vector<8xf32>
    %140 = vector.multi_reduction <add>, %139, %cst_57 [1] : vector<8x8xf32> to vector<8xf32>
    %141 = vector.shape_cast %140 : vector<8xf32> to vector<8x1xf32>
    %142 = tpu.reciprocal %141 {approx = true} : vector<8x1xf32> -> vector<8x1xf32>
    %143 = arith.mulf %141, %142 : vector<8x1xf32>
    %cst_58 = arith.constant 2.000000e+00 : f32
    %144 = vector.broadcast %cst_58 : f32 to vector<8x1xf32>
    %145 = arith.subf %144, %143 : vector<8x1xf32>
    %146 = arith.mulf %142, %145 : vector<8x1xf32>
    %147 = vector.broadcast %146 : vector<8x1xf32> to vector<8x8xf32>
    %148 = arith.mulf %139, %147 : vector<8x8xf32>
    %c0_59 = arith.constant 0 : index
    %c104 = arith.constant 104 : index
    %149 = vector.load %arg12[%c0_59, %c104] : memref<8x128xf32, #tpu.memory_space<vmem>>, vector<8x8xf32>
    tpu.vector_store %arg12[%c0_59, %c104], %148 {strides = array<i32>} : memref<8x128xf32, #tpu.memory_space<vmem>>, vector<8x8xf32>,
    %cst_60 = arith.constant dense<0.000000e+00> : vector<8x8xf32>
    %150 = tpu.matmul %148, %131, %cst_60 {dimension_numbers = #tpu.dot_dimension_numbers<[1], [0], [0], [1], [0, 0, 1, 1], [], []>} : vector<8x8xf32>, vector<8x8xf32>, vector<8x8xf32> -> vector<8x8xf32>
    %151 = vector.extract_strided_slice %5 {offsets = [8, 16], sizes = [8, 8], strides = [1, 1]} : vector<16x32xf32> to vector<8x8xf32>
    %152 = vector.extract_strided_slice %11 {offsets = [8, 16], sizes = [8, 8], strides = [1, 1]} : vector<16x32xf32> to vector<8x8xf32>
    %153 = vector.extract_strided_slice %17 {offsets = [8, 16], sizes = [8, 8], strides = [1, 1]} : vector<16x32xf32> to vector<8x8xf32>
    %cst_61 = arith.constant dense<0.000000e+00> : vector<8x8xf32>
    %154 = tpu.matmul %151, %152, %cst_61 {dimension_numbers = #tpu.dot_dimension_numbers<[1], [1], [0], [0], [0, 0, 1, 0], [], []>} : vector<8x8xf32>, vector<8x8xf32>, vector<8x8xf32> -> vector<8x8xf32>
    %cst_62 = arith.constant 0.353553385 : f32
    %155 = vector.broadcast %cst_62 : f32 to vector<8x8xf32>
    %156 = arith.mulf %154, %155 : vector<8x8xf32>
    %cst_63 = arith.constant dense<0xFF800000> : vector<8xf32>
    %157 = vector.multi_reduction <maximumf>, %156, %cst_63 [1] : vector<8x8xf32> to vector<8xf32>
    %158 = vector.shape_cast %157 : vector<8xf32> to vector<8x1xf32>
    %159 = vector.broadcast %158 : vector<8x1xf32> to vector<8x8xf32>
    %160 = arith.subf %156, %159 : vector<8x8xf32>
    %161 = math.exp %160 : vector<8x8xf32>
    %cst_64 = arith.constant dense<0.000000e+00> : vector<8xf32>
    %162 = vector.multi_reduction <add>, %161, %cst_64 [1] : vector<8x8xf32> to vector<8xf32>
    %163 = vector.shape_cast %162 : vector<8xf32> to vector<8x1xf32>
    %164 = tpu.reciprocal %163 {approx = true} : vector<8x1xf32> -> vector<8x1xf32>
    %165 = arith.mulf %163, %164 : vector<8x1xf32>
    %cst_65 = arith.constant 2.000000e+00 : f32
    %166 = vector.broadcast %cst_65 : f32 to vector<8x1xf32>
    %167 = arith.subf %166, %165 : vector<8x1xf32>
    %168 = arith.mulf %164, %167 : vector<8x1xf32>
    %169 = vector.broadcast %168 : vector<8x1xf32> to vector<8x8xf32>
    %170 = arith.mulf %161, %169 : vector<8x8xf32>
    %c0_66 = arith.constant 0 : index
    %c112 = arith.constant 112 : index
    %171 = vector.load %arg12[%c0_66, %c112] : memref<8x128xf32, #tpu.memory_space<vmem>>, vector<8x8xf32>
    tpu.vector_store %arg12[%c0_66, %c112], %170 {strides = array<i32>} : memref<8x128xf32, #tpu.memory_space<vmem>>, vector<8x8xf32>,
    %cst_67 = arith.constant dense<0.000000e+00> : vector<8x8xf32>
    %172 = tpu.matmul %170, %153, %cst_67 {dimension_numbers = #tpu.dot_dimension_numbers<[1], [0], [0], [1], [0, 0, 1, 1], [], []>} : vector<8x8xf32>, vector<8x8xf32>, vector<8x8xf32> -> vector<8x8xf32>
    %173 = vector.extract_strided_slice %5 {offsets = [8, 24], sizes = [8, 8], strides = [1, 1]} : vector<16x32xf32> to vector<8x8xf32>
    %174 = vector.extract_strided_slice %11 {offsets = [8, 24], sizes = [8, 8], strides = [1, 1]} : vector<16x32xf32> to vector<8x8xf32>
    %175 = vector.extract_strided_slice %17 {offsets = [8, 24], sizes = [8, 8], strides = [1, 1]} : vector<16x32xf32> to vector<8x8xf32>
    %cst_68 = arith.constant dense<0.000000e+00> : vector<8x8xf32>
    %176 = tpu.matmul %173, %174, %cst_68 {dimension_numbers = #tpu.dot_dimension_numbers<[1], [1], [0], [0], [0, 0, 1, 0], [], []>} : vector<8x8xf32>, vector<8x8xf32>, vector<8x8xf32> -> vector<8x8xf32>
    %cst_69 = arith.constant 0.353553385 : f32
    %177 = vector.broadcast %cst_69 : f32 to vector<8x8xf32>
    %178 = arith.mulf %176, %177 : vector<8x8xf32>
    %cst_70 = arith.constant dense<0xFF800000> : vector<8xf32>
    %179 = vector.multi_reduction <maximumf>, %178, %cst_70 [1] : vector<8x8xf32> to vector<8xf32>
    %180 = vector.shape_cast %179 : vector<8xf32> to vector<8x1xf32>
    %181 = vector.broadcast %180 : vector<8x1xf32> to vector<8x8xf32>
    %182 = arith.subf %178, %181 : vector<8x8xf32>
    %183 = math.exp %182 : vector<8x8xf32>
    %cst_71 = arith.constant dense<0.000000e+00> : vector<8xf32>
    %184 = vector.multi_reduction <add>, %183, %cst_71 [1] : vector<8x8xf32> to vector<8xf32>
    %185 = vector.shape_cast %184 : vector<8xf32> to vector<8x1xf32>
    %186 = tpu.reciprocal %185 {approx = true} : vector<8x1xf32> -> vector<8x1xf32>
    %187 = arith.mulf %185, %186 : vector<8x1xf32>
    %cst_72 = arith.constant 2.000000e+00 : f32
    %188 = vector.broadcast %cst_72 : f32 to vector<8x1xf32>
    %189 = arith.subf %188, %187 : vector<8x1xf32>
    %190 = arith.mulf %186, %189 : vector<8x1xf32>
    %191 = vector.broadcast %190 : vector<8x1xf32> to vector<8x8xf32>
    %192 = arith.mulf %183, %191 : vector<8x8xf32>
    %c0_73 = arith.constant 0 : index
    %c120 = arith.constant 120 : index
    %193 = vector.load %arg12[%c0_73, %c120] : memref<8x128xf32, #tpu.memory_space<vmem>>, vector<8x8xf32>
    tpu.vector_store %arg12[%c0_73, %c120], %192 {strides = array<i32>} : memref<8x128xf32, #tpu.memory_space<vmem>>, vector<8x8xf32>,
    %cst_74 = arith.constant dense<0.000000e+00> : vector<8x8xf32>
    %194 = tpu.matmul %192, %175, %cst_74 {dimension_numbers = #tpu.dot_dimension_numbers<[1], [0], [0], [1], [0, 0, 1, 1], [], []>} : vector<8x8xf32>, vector<8x8xf32>, vector<8x8xf32> -> vector<8x8xf32>
    %195 = tpu.concatenate %128, %150, %172, %194 in 1 : vector<8x8xf32>, vector<8x8xf32>, vector<8x8xf32>, vector<8x8xf32> -> vector<8x32xf32>
    %196 = tpu.concatenate %106, %195 in 0 : vector<8x32xf32>, vector<8x32xf32> -> vector<16x32xf32>
    %c0_75 = arith.constant 0 : index
    %c0_76 = arith.constant 0 : index
    %197 = vector.load %arg10[%c0_75, %c0_76] : memref<32x32xf32, #tpu.memory_space<vmem>>, vector<32x32xf32>
    %cst_77 = arith.constant dense<0.000000e+00> : vector<16x32xf32>
    %198 = tpu.matmul %196, %197, %cst_77 {dimension_numbers = #tpu.dot_dimension_numbers<[1], [0], [0], [1], [0, 0, 1, 1], [], []>} : vector<16x32xf32>, vector<32x32xf32>, vector<16x32xf32> -> vector<16x32xf32>
    %c0_78 = arith.constant 0 : index
    %c0_79 = arith.constant 0 : index
    %199 = vector.load %arg11[%c0_78, %c0_79] : memref<1x32xf32, #tpu.memory_space<vmem>>, vector<1x32xf32>
    %200 = vector.broadcast %199 : vector<1x32xf32> to vector<16x32xf32>
    %201 = arith.addf %198, %200 : vector<16x32xf32>
    %202 = vector.extract_strided_slice %201 {offsets = [0, 0], sizes = [8, 32], strides = [1, 1]} : vector<16x32xf32> to vector<8x32xf32>
    %c0_80 = arith.constant 0 : index
    %c0_81 = arith.constant 0 : index
    %203 = vector.load %arg12[%c0_80, %c0_81] : memref<8x128xf32, #tpu.memory_space<vmem>>, vector<8x32xf32>
    tpu.vector_store %arg12[%c0_80, %c0_81], %202 {strides = array<i32>} : memref<8x128xf32, #tpu.memory_space<vmem>>, vector<8x32xf32>,
    %204 = vector.extract_strided_slice %201 {offsets = [8, 0], sizes = [8, 32], strides = [1, 1]} : vector<16x32xf32> to vector<8x32xf32>
    %c0_82 = arith.constant 0 : index
    %c32 = arith.constant 32 : index
    %205 = vector.load %arg12[%c0_82, %c32] : memref<8x128xf32, #tpu.memory_space<vmem>>, vector<8x32xf32>
    tpu.vector_store %arg12[%c0_82, %c32], %204 {strides = array<i32>} : memref<8x128xf32, #tpu.memory_space<vmem>>, vector<8x32xf32>,
    return
  }
  func.func @transform_0(%arg0: i32) -> (i32, i32) {
    %c0_i32 = arith.constant 0 : i32
    %c0_i32_0 = arith.constant 0 : i32
    %c0_i32_1 = arith.constant 0 : i32
    return %c0_i32, %c0_i32_0 : i32, i32
  }
  func.func @transform_1(%arg0: i32) -> (i32, i32) {
    %c0_i32 = arith.constant 0 : i32
    %c0_i32_0 = arith.constant 0 : i32
    %c0_i32_1 = arith.constant 0 : i32
    return %c0_i32, %c0_i32_0 : i32, i32
  }
  func.func @transform_2(%arg0: i32) -> (i32, i32) {
    %c0_i32 = arith.constant 0 : i32
    %c0_i32_0 = arith.constant 0 : i32
    %c0_i32_1 = arith.constant 0 : i32
    return %c0_i32, %c0_i32_0 : i32, i32
  }
  func.func @transform_3(%arg0: i32) -> (i32, i32) {
    %c0_i32 = arith.constant 0 : i32
    %c0_i32_0 = arith.constant 0 : i32
    %c0_i32_1 = arith.constant 0 : i32
    return %c0_i32, %c0_i32_0 : i32, i32
  }
  func.func @transform_4(%arg0: i32) -> (i32, i32) {
    %c0_i32 = arith.constant 0 : i32
    %c0_i32_0 = arith.constant 0 : i32
    %c0_i32_1 = arith.constant 0 : i32
    return %c0_i32, %c0_i32_0 : i32, i32
  }
  func.func @transform_5(%arg0: i32) -> (i32, i32) {
    %c0_i32 = arith.constant 0 : i32
    %c0_i32_0 = arith.constant 0 : i32
    %c0_i32_1 = arith.constant 0 : i32
    return %c0_i32, %c0_i32_0 : i32, i32
  }
  func.func @transform_6(%arg0: i32) -> (i32, i32) {
    %c0_i32 = arith.constant 0 : i32
    %c0_i32_0 = arith.constant 0 : i32
    %c0_i32_1 = arith.constant 0 : i32
    return %c0_i32, %c0_i32_0 : i32, i32
  }
  func.func @transform_7(%arg0: i32) -> (i32, i32) {
    %c0_i32 = arith.constant 0 : i32
    %c0_i32_0 = arith.constant 0 : i32
    %c0_i32_1 = arith.constant 0 : i32
    return %c0_i32, %c0_i32_0 : i32, i32
  }
  func.func @transform_8(%arg0: i32) -> (i32, i32) {
    %c0_i32 = arith.constant 0 : i32
    %c0_i32_0 = arith.constant 0 : i32
    %c0_i32_1 = arith.constant 0 : i32
    return %c0_i32, %c0_i32_0 : i32, i32
  }
  func.func @transform_9(%arg0: i32) -> (i32, i32) {
    %c0_i32 = arith.constant 0 : i32
    %c0_i32_0 = arith.constant 0 : i32
    %c0_i32_1 = arith.constant 0 : i32
    return %c0_i32, %c0_i32_0 : i32, i32
  }
  func.func @transform_10(%arg0: i32) -> (i32, i32) {
    %c0_i32 = arith.constant 0 : i32
    %c0_i32_0 = arith.constant 0 : i32
    %c0_i32_1 = arith.constant 0 : i32
    return %c0_i32, %c0_i32_0 : i32, i32
  }
  func.func @transform_11(%arg0: i32) -> (i32, i32) {
    %c0_i32 = arith.constant 0 : i32
    %c0_i32_0 = arith.constant 0 : i32
    %c0_i32_1 = arith.constant 0 : i32
    return %c0_i32, %c0_i32_0 : i32, i32
  }
}

</mosaic_0001>

<llo_original>
// kernel: tpu_custom_call.1
$region0: #{tpu_custom_call.1}
  #allocation0 [shape = 'u32[]', space=smem, size = 0x4, offset = 0x4, fixed_abs, tag = 'smem constant byte address 0x4 - core index']
  #allocation1 [shape = 'u32[144,128]{1,0:T(1,128)}', space=vmem, size = 0x12000, scoped, tag = 'internal scratch']
  %s0 = inlined_call_operand.hbm [shape: f32[16,32], index: 0, kind: input, shape index: {}]
  %s1 = inlined_call_operand.hbm [shape: f32[16,32], index: 1, kind: input, shape index: {}]
  %s2 = inlined_call_operand.hbm [shape: f32[16,32], index: 2, kind: input, shape index: {}]
  %s3 = inlined_call_operand.hbm [shape: f32[32,32], index: 3, kind: input, shape index: {}]
  %s4 = inlined_call_operand.vmem [shape: f32[1,32], index: 4, kind: input, shape index: {}]
  %s5 = inlined_call_operand.hbm [shape: f32[32,32], index: 5, kind: input, shape index: {}]
  %s6 = inlined_call_operand.vmem [shape: f32[1,32], index: 6, kind: input, shape index: {}]
  %s7 = inlined_call_operand.hbm [shape: f32[32,32], index: 7, kind: input, shape index: {}]
  %s8 = inlined_call_operand.hbm [shape: f32[1,32], index: 8, kind: input, shape index: {}]
  %s9 = inlined_call_operand.vmem [shape: f32[32,32], index: 9, kind: input, shape index: {}]
  %s10 = inlined_call_operand.vmem [shape: f32[1,32], index: 10, kind: input, shape index: {}]
  %s11 = inlined_call_operand.hbm [shape: f32[8,128], index: 11, kind: output, shape index: {}]
  %s12 = sld [smem:[#allocation0]]
  $region82: #{tpu_custom_call.1} parent=0
    _
  %s14 = ssub.s32 1, %s12
  %s15 = scalar_select 0, %s14, %s12
  $region1: #{tpu_custom_call.1} parent=0
    #allocation2 [shape = 'u8[8192]{0}', space=vmem, size = 0x2000, scoped, tag = 'input window, operand 0, single buffered']
    #allocation3 [shape = 's32[1]{0}', space=sflag, size = 0x4, scoped, tag = 'scoped memory for tpu_custom_call.1']
    #allocation4 [shape = 's32[1]{0}', space=sflag, size = 0x4, scoped, tag = 'scoped memory for tpu_custom_call.1']
    #allocation5 [shape = 'u8[8192]{0}', space=vmem, size = 0x2000, scoped, tag = 'input window, operand 1, single buffered']
    #allocation6 [shape = 's32[1]{0}', space=sflag, size = 0x4, scoped, tag = 'scoped memory for tpu_custom_call.1']
    #allocation7 [shape = 'u8[8192]{0}', space=vmem, size = 0x2000, scoped, tag = 'input window, operand 2, single buffered']
    #allocation8 [shape = 'u8[16384]{0}', space=vmem, size = 0x4000, scoped, tag = 'input window, operand 3, single buffered']
    #allocation9 [shape = 's32[1]{0}', space=sflag, size = 0x4, scoped, tag = 'scoped memory for tpu_custom_call.1']
    #allocation10 [shape = 'u8[16384]{0}', space=vmem, size = 0x4000, scoped, tag = 'input window, operand 5, single buffered']
    #allocation11 [shape = 'u8[16384]{0}', space=vmem, size = 0x4000, scoped, tag = 'input window, operand 7, single buffered']
    #allocation12 [shape = 's32[1]{0}', space=sflag, size = 0x4, scoped, tag = 'scoped memory for tpu_custom_call.1']
    #allocation13 [shape = 'u8[512]{0}', space=vmem, size = 0x400, scoped, tag = 'input window, operand 8, single buffered']
    #allocation14 [shape = 'u8[4096]{0}', space=vmem, size = 0x1000, scoped, tag = 'output window, operand 0, single buffered']
    %16 = vsyncpa [#allocation3], 0
    %17 = vsyncpa [#allocation6], 0
    %18 = vsyncpa [#allocation9], 0
    %19 = vsyncpa [#allocation12], 0
    %20 = vsyncpa [#allocation4], 0
    // Predicated region
    $region2: #{tpu_custom_call.1} parent=1 // pred_check
      _
    $region3: #{tpu_custom_call.1} parent=1 // pred_check_branch
      %22 = sbr.rel (0) target = $region5
    $region4: #{tpu_custom_call.1} parent=1 // pred_region
      %s24 = ssub.s32 256, 256
      %25 = vsyncadd [#allocation3], %s24
      %s26 = sshll.u32 [#allocation2], 4
      %s27 = int_to_ptr.vmem [resolvable:$true] %s26
      %32 = dma.hbm_to_vmem [thread:$0]  %s0, 256, %s27, [#allocation3], 128, 128, 8
    $region5: #{tpu_custom_call.1} parent=1 // pred_fallthru
      _
    // Predicated region
    $region6: #{tpu_custom_call.1} parent=1 // pred_check
      _
    $region7: #{tpu_custom_call.1} parent=1 // pred_check_branch
      %34 = sbr.rel (0) target = $region9
    $region8: #{tpu_custom_call.1} parent=1 // pred_region
      %s36 = ssub.s32 256, 256
      %37 = vsyncadd [#allocation6], %s36
      %s38 = sshll.u32 [#allocation5], 4
      %s39 = int_to_ptr.vmem [resolvable:$true] %s38
      %44 = dma.hbm_to_vmem [thread:$0]  %s1, 256, %s39, [#allocation6], 128, 128, 8
    $region9: #{tpu_custom_call.1} parent=1 // pred_fallthru
      _
    // Predicated region
    $region10: #{tpu_custom_call.1} parent=1 // pred_check
      _
    $region11: #{tpu_custom_call.1} parent=1 // pred_check_branch
      %46 = sbr.rel (0) target = $region13
    $region12: #{tpu_custom_call.1} parent=1 // pred_region
      %s48 = ssub.s32 256, 256
      %49 = vsyncadd [#allocation6], %s48
      %s50 = sshll.u32 [#allocation7], 4
      %s51 = int_to_ptr.vmem [resolvable:$true] %s50
      %56 = dma.hbm_to_vmem [thread:$0]  %s2, 256, %s51, [#allocation6], 128, 128, 8
    $region13: #{tpu_custom_call.1} parent=1 // pred_fallthru
      _
    // Predicated region
    $region14: #{tpu_custom_call.1} parent=1 // pred_check
      _
    $region15: #{tpu_custom_call.1} parent=1 // pred_check_branch
      %58 = sbr.rel (0) target = $region17
    $region16: #{tpu_custom_call.1} parent=1 // pred_region
      %s60 = ssub.s32 512, 512
      %61 = vsyncadd [#allocation9], %s60
      %s62 = sshll.u32 [#allocation8], 4
      %s63 = int_to_ptr.vmem [resolvable:$true] %s62
      %68 = dma.hbm_to_vmem [thread:$0]  %s3, 512, %s63, [#allocation9], 128, 128, 8
    $region17: #{tpu_custom_call.1} parent=1 // pred_fallthru
      _
    // Predicated region
    $region18: #{tpu_custom_call.1} parent=1 // pred_check
      _
    $region19: #{tpu_custom_call.1} parent=1 // pred_check_branch
      %70 = sbr.rel (0) target = $region21
    $region20: #{tpu_custom_call.1} parent=1 // pred_region
      _
    $region21: #{tpu_custom_call.1} parent=1 // pred_fallthru
      _
    // Predicated region
    $region22: #{tpu_custom_call.1} parent=1 // pred_check
      _
    $region23: #{tpu_custom_call.1} parent=1 // pred_check_branch
      %72 = sbr.rel (0) target = $region25
    $region24: #{tpu_custom_call.1} parent=1 // pred_region
      %s74 = ssub.s32 512, 512
      %75 = vsyncadd [#allocation9], %s74
      %s76 = sshll.u32 [#allocation10], 4
      %s77 = int_to_ptr.vmem [resolvable:$true] %s76
      %82 = dma.hbm_to_vmem [thread:$0]  %s5, 512, %s77, [#allocation9], 128, 128, 8
    $region25: #{tpu_custom_call.1} parent=1 // pred_fallthru
      _
    // Predicated region
    $region26: #{tpu_custom_call.1} parent=1 // pred_check
      _
    $region27: #{tpu_custom_call.1} parent=1 // pred_check_branch
      %84 = sbr.rel (0) target = $region29
    $region28: #{tpu_custom_call.1} parent=1 // pred_region
      _
    $region29: #{tpu_custom_call.1} parent=1 // pred_fallthru
      _
    // Predicated region
    $region30: #{tpu_custom_call.1} parent=1 // pred_check
      _
    $region31: #{tpu_custom_call.1} parent=1 // pred_check_branch
      %86 = sbr.rel (0) target = $region33
    $region32: #{tpu_custom_call.1} parent=1 // pred_region
      %s88 = ssub.s32 512, 512
      %89 = vsyncadd [#allocation12], %s88
      %s90 = sshll.u32 [#allocation11], 4
      %s91 = int_to_ptr.vmem [resolvable:$true] %s90
      %96 = dma.hbm_to_vmem [thread:$0]  %s7, 512, %s91, [#allocation12], 128, 128, 8
    $region33: #{tpu_custom_call.1} parent=1 // pred_fallthru
      _
    // Predicated region
    $region34: #{tpu_custom_call.1} parent=1 // pred_check
      _
    $region35: #{tpu_custom_call.1} parent=1 // pred_check_branch
      %98 = sbr.rel (0) target = $region37
    $region36: #{tpu_custom_call.1} parent=1 // pred_region
      %s100 = ssub.s32 16, 16
      %101 = vsyncadd [#allocation12], %s100
      %s103 = sshll.u32 [#allocation13], 4
      %s104 = int_to_ptr.vmem [resolvable:$true] %s103
      %106 = dma.hbm_to_vmem [thread:$0]  %s8, 16, %s104, [#allocation12]
    $region37: #{tpu_custom_call.1} parent=1 // pred_fallthru
      _
    // Predicated region
    $region38: #{tpu_custom_call.1} parent=1 // pred_check
      _
    $region39: #{tpu_custom_call.1} parent=1 // pred_check_branch
      %108 = sbr.rel (0) target = $region41
    $region40: #{tpu_custom_call.1} parent=1 // pred_region
      _
    $region41: #{tpu_custom_call.1} parent=1 // pred_fallthru
      _
    // Predicated region
    $region42: #{tpu_custom_call.1} parent=1 // pred_check
      _
    $region43: #{tpu_custom_call.1} parent=1 // pred_check_branch
      %110 = sbr.rel (0) target = $region45
    $region44: #{tpu_custom_call.1} parent=1 // pred_region
      _
    $region45: #{tpu_custom_call.1} parent=1 // pred_fallthru
      _
    // Predicated region
    $region46: #{tpu_custom_call.1} parent=1 // pred_check
      _
    $region47: #{tpu_custom_call.1} parent=1 // pred_check_branch
      %112 = sbr.rel (0) target = $region49
    $region48: #{tpu_custom_call.1} parent=1 // pred_region
      %113 = dma.done [#allocation3], 256
    $region49: #{tpu_custom_call.1} parent=1 // pred_fallthru
      _
    // Predicated region
    $region50: #{tpu_custom_call.1} parent=1 // pred_check
      _
    $region51: #{tpu_custom_call.1} parent=1 // pred_check_branch
      %115 = sbr.rel (0) target = $region53
    $region52: #{tpu_custom_call.1} parent=1 // pred_region
      %116 = dma.done [#allocation6], 256
    $region53: #{tpu_custom_call.1} parent=1 // pred_fallthru
      _
    // Predicated region
    $region54: #{tpu_custom_call.1} parent=1 // pred_check
      _
    $region55: #{tpu_custom_call.1} parent=1 // pred_check_branch
      %118 = sbr.rel (0) target = $region57
    $region56: #{tpu_custom_call.1} parent=1 // pred_region
      %119 = dma.done [#allocation6], 256
    $region57: #{tpu_custom_call.1} parent=1 // pred_fallthru
      _
    // Predicated region
    $region58: #{tpu_custom_call.1} parent=1 // pred_check
      _
    $region59: #{tpu_custom_call.1} parent=1 // pred_check_branch
      %121 = sbr.rel (0) target = $region61
    $region60: #{tpu_custom_call.1} parent=1 // pred_region
      %122 = dma.done [#allocation9], 512
    $region61: #{tpu_custom_call.1} parent=1 // pred_fallthru
      _
    // Predicated region
    $region62: #{tpu_custom_call.1} parent=1 // pred_check
      _
    $region63: #{tpu_custom_call.1} parent=1 // pred_check_branch
      %124 = sbr.rel (0) target = $region65
    $region64: #{tpu_custom_call.1} parent=1 // pred_region
      %125 = dma.done [#allocation9], 512
    $region65: #{tpu_custom_call.1} parent=1 // pred_fallthru
      _
    // Predicated region
    $region66: #{tpu_custom_call.1} parent=1 // pred_check
      _
    $region67: #{tpu_custom_call.1} parent=1 // pred_check_branch
      %127 = sbr.rel (0) target = $region69
    $region68: #{tpu_custom_call.1} parent=1 // pred_region
      %128 = dma.done [#allocation12], 512
    $region69: #{tpu_custom_call.1} parent=1 // pred_fallthru
      _
    // Predicated region
    $region70: #{tpu_custom_call.1} parent=1 // pred_check
      _
    $region71: #{tpu_custom_call.1} parent=1 // pred_check_branch
      %130 = sbr.rel (0) target = $region73
    $region72: #{tpu_custom_call.1} parent=1 // pred_region
      %131 = dma.done [#allocation12], 16
    $region73: #{tpu_custom_call.1} parent=1 // pred_fallthru
      _
    %v132 = vld [vmem:[#allocation2] sm:$0xff]
    %v133 = vld [vmem:[#allocation2 + $0x8] sm:$0xff]
    %v134 = vld [vmem:[#allocation8] sm:$0xff]
    %v135 = vld [vmem:[#allocation8 + $0x8] sm:$0xff]
    %v136 = vld [vmem:[#allocation8 + $0x10] sm:$0xff]
    %v137 = vld [vmem:[#allocation8 + $0x18] sm:$0xff]
    %v138 = vld [vmem:[%s4] sm:$0x1]
    %v140 = vlaneseq
    %v141 = vshrl.u32 %v140, 7
    %v142 = vsub.s32 0, %v141
    %v143 = vrot.slane %v138, %v142
    %vm145 = vcmask 261120
    %v147 = vsel %vm145, %v132, 0
    %v150 = vsel %vm145, %v133, 0
    %152 = vmatprep.subr.mxu0 0.0
    %153 = vmatpush1.msra.mxu0 %v134
    %154 = vmatprep.subr.mxu0 0.0
    %155 = vmatpush1.msra.mxu0 %v135
    %156 = vmatprep.subr.mxu0 0.0
    %157 = vmatpush1.msra.mxu0 %v136
    %158 = vmatprep.subr.mxu0 0.0
    %159 = vmatpush1.msra.mxu0 %v137
    %160 = vmatprep.subr.mxu0 0.0
    %161 = vmatpush1.msra.mxu0 0.0
    %162 = vmatprep.subr.mxu0 0.0
    %163 = vmatpush1.msra.mxu0 0.0
    %164 = vmatprep.subr.mxu0 0.0
    %165 = vmatpush1.msra.mxu0 0.0
    %166 = vmatprep.subr.mxu0 0.0
    %167 = vmatpush1.msra.mxu0 0.0
    %168 = vmatprep.subr.mxu0 0.0
    %169 = vmatpush1.msra.mxu0 0.0
    %170 = vmatprep.subr.mxu0 0.0
    %171 = vmatpush1.msra.mxu0 0.0
    %172 = vmatprep.subr.mxu0 0.0
    %173 = vmatpush1.msra.mxu0 0.0
    %174 = vmatprep.subr.mxu0 0.0
    %175 = vmatpush1.msra.mxu0 0.0
    %176 = vmatprep.subr.mxu0 0.0
    %177 = vmatpush1.msra.mxu0 0.0
    %178 = vmatprep.subr.mxu0 0.0
    %179 = vmatpush1.msra.mxu0 0.0
    %180 = vmatprep.subr.mxu0 0.0
    %181 = vmatpush1.msra.mxu0 0.0
    %182 = vmatprep.subr.mxu0 0.0
    %183 = vmatpush1.msra.mxu0 0.0
    %184 = vmatprep.subr.mxu0 0.0
    %185 = vmatpush1.msra.mxu0 0.0
    %186 = vmatprep.subr.mxu0 0.0
    %187 = vmatpush1.msra.mxu0 0.0
    %188 = vmatprep.subr.mxu0 0.0
    %189 = vmatpush1.msra.mxu0 0.0
    %190 = vmatprep.subr.mxu0 0.0
    %191 = vmatpush1.msra.mxu0 0.0
    %192 = vmatprep.subr.mxu0 0.0
    %193 = vmatpush1.msra.mxu0 0.0
    %194 = vmatprep.subr.mxu0 0.0
    %195 = vmatpush1.msra.mxu0 0.0
    %196 = vmatprep.subr.mxu0 0.0
    %197 = vmatpush1.msra.mxu0 0.0
    %198 = vmatprep.subr.mxu0 0.0
    %199 = vmatpush1.msra.mxu0 0.0
    %200 = vmatprep.subr.mxu0 0.0
    %201 = vmatpush1.msra.mxu0 0.0
    %202 = vmatprep.subr.mxu0 0.0
    %203 = vmatpush1.msra.mxu0 0.0
    %204 = vmatprep.subr.mxu0 0.0
    %205 = vmatpush1.msra.mxu0 0.0
    %206 = vmatprep.subr.mxu0 0.0
    %207 = vmatpush1.msra.mxu0 0.0
    %208 = vmatprep.subr.mxu0 0.0
    %209 = vmatpush1.msra.mxu0 0.0
    %210 = vmatprep.subr.mxu0 0.0
    %211 = vmatpush1.msra.mxu0 0.0
    %212 = vmatprep.subr.mxu0 0.0
    %213 = vmatpush1.msra.mxu0 0.0
    %214 = vmatprep.subr.mxu0 0.0
    %215 = vmatpush1.msra.mxu0 0.0
    %216 = vmatprep.mubr.f32.mxu0 0.0
    %217 = vmatmul.mubr.f32.gmra.mrb[0].mxu0 %v147
    %v218 = vpop.f32.mrb[0].mxu0
    %v219 = vadd.f32 %v143, %v218
    %v220 = vpop.f32.mrb[0].mxu0
    %221 = vmatprep.mubr.f32.mxu0 0.0
    %222 = vmatmul.mubr.f32.gmra.mrb[0].mxu0 %v150
    %v223 = vpop.f32.mrb[0].mxu0
    %v224 = vadd.f32 %v143, %v223
    %v225 = vpop.f32.mrb[0].mxu0
    %226 = vdwg.mxu0
    %v227 = vld [vmem:[#allocation5] sm:$0xff]
    %v228 = vld [vmem:[#allocation5 + $0x8] sm:$0xff]
    %v229 = vld [vmem:[#allocation10] sm:$0xff]
    %v230 = vld [vmem:[#allocation10 + $0x8] sm:$0xff]
    %v231 = vld [vmem:[#allocation10 + $0x10] sm:$0xff]
    %v232 = vld [vmem:[#allocation10 + $0x18] sm:$0xff]
    %v233 = vld [vmem:[%s6] sm:$0x1]
    %v235 = vlaneseq
    %v236 = vshrl.u32 %v235, 7
    %v237 = vsub.s32 0, %v236
    %v238 = vrot.slane %v233, %v237
    %v241 = vsel %vm145, %v227, 0
    %v244 = vsel %vm145, %v228, 0
    %246 = vmatprep.subr.mxu0 0.0
    %247 = vmatpush1.msra.mxu0 %v229
    %248 = vmatprep.subr.mxu0 0.0
    %249 = vmatpush1.msra.mxu0 %v230
    %250 = vmatprep.subr.mxu0 0.0
    %251 = vmatpush1.msra.mxu0 %v231
    %252 = vmatprep.subr.mxu0 0.0
    %253 = vmatpush1.msra.mxu0 %v232
    %254 = vmatprep.subr.mxu0 0.0
    %255 = vmatpush1.msra.mxu0 0.0
    %256 = vmatprep.subr.mxu0 0.0
    %257 = vmatpush1.msra.mxu0 0.0
    %258 = vmatprep.subr.mxu0 0.0
    %259 = vmatpush1.msra.mxu0 0.0
    %260 = vmatprep.subr.mxu0 0.0
    %261 = vmatpush1.msra.mxu0 0.0
    %262 = vmatprep.subr.mxu0 0.0
    %263 = vmatpush1.msra.mxu0 0.0
    %264 = vmatprep.subr.mxu0 0.0
    %265 = vmatpush1.msra.mxu0 0.0
    %266 = vmatprep.subr.mxu0 0.0
    %267 = vmatpush1.msra.mxu0 0.0
    %268 = vmatprep.subr.mxu0 0.0
    %269 = vmatpush1.msra.mxu0 0.0
    %270 = vmatprep.subr.mxu0 0.0
    %271 = vmatpush1.msra.mxu0 0.0
    %272 = vmatprep.subr.mxu0 0.0
    %273 = vmatpush1.msra.mxu0 0.0
    %274 = vmatprep.subr.mxu0 0.0
    %275 = vmatpush1.msra.mxu0 0.0
    %276 = vmatprep.subr.mxu0 0.0
    %277 = vmatpush1.msra.mxu0 0.0
    %278 = vmatprep.subr.mxu0 0.0
    %279 = vmatpush1.msra.mxu0 0.0
    %280 = vmatprep.subr.mxu0 0.0
    %281 = vmatpush1.msra.mxu0 0.0
    %282 = vmatprep.subr.mxu0 0.0
    %283 = vmatpush1.msra.mxu0 0.0
    %284 = vmatprep.subr.mxu0 0.0
    %285 = vmatpush1.msra.mxu0 0.0
    %286 = vmatprep.subr.mxu0 0.0
    %287 = vmatpush1.msra.mxu0 0.0
    %288 = vmatprep.subr.mxu0 0.0
    %289 = vmatpush1.msra.mxu0 0.0
    %290 = vmatprep.subr.mxu0 0.0
    %291 = vmatpush1.msra.mxu0 0.0
    %292 = vmatprep.subr.mxu0 0.0
    %293 = vmatpush1.msra.mxu0 0.0
    %294 = vmatprep.subr.mxu0 0.0
    %295 = vmatpush1.msra.mxu0 0.0
    %296 = vmatprep.subr.mxu0 0.0
    %297 = vmatpush1.msra.mxu0 0.0
    %298 = vmatprep.subr.mxu0 0.0
    %299 = vmatpush1.msra.mxu0 0.0
    %300 = vmatprep.subr.mxu0 0.0
    %301 = vmatpush1.msra.mxu0 0.0
    %302 = vmatprep.subr.mxu0 0.0
    %303 = vmatpush1.msra.mxu0 0.0
    %304 = vmatprep.subr.mxu0 0.0
    %305 = vmatpush1.msra.mxu0 0.0
    %306 = vmatprep.subr.mxu0 0.0
    %307 = vmatpush1.msra.mxu0 0.0
    %308 = vmatprep.subr.mxu0 0.0
    %309 = vmatpush1.msra.mxu0 0.0
    %310 = vmatprep.mubr.f32.mxu0 0.0
    %311 = vmatmul.mubr.f32.gmra.mrb[0].mxu0 %v241
    %v312 = vpop.f32.mrb[0].mxu0
    %v313 = vadd.f32 %v238, %v312
    %v314 = vpop.f32.mrb[0].mxu0
    %315 = vmatprep.mubr.f32.mxu0 0.0
    %316 = vmatmul.mubr.f32.gmra.mrb[0].mxu0 %v244
    %v317 = vpop.f32.mrb[0].mxu0
    %v318 = vadd.f32 %v238, %v317
    %v319 = vpop.f32.mrb[0].mxu0
    %320 = vdwg.mxu0
    %v321 = vld [vmem:[#allocation7] sm:$0xff]
    %v322 = vld [vmem:[#allocation7 + $0x8] sm:$0xff]
    %v323 = vld [vmem:[#allocation11] sm:$0xff]
    %v324 = vld [vmem:[#allocation11 + $0x8] sm:$0xff]
    %v325 = vld [vmem:[#allocation11 + $0x10] sm:$0xff]
    %v326 = vld [vmem:[#allocation11 + $0x18] sm:$0xff]
    %v327 = vld [vmem:[#allocation13] sm:$0x1]
    %v329 = vlaneseq
    %v330 = vshrl.u32 %v329, 7
    %v331 = vsub.s32 0, %v330
    %v332 = vrot.slane %v327, %v331
    %v335 = vsel %vm145, %v321, 0
    %v338 = vsel %vm145, %v322, 0
    %340 = vmatprep.subr.mxu0 0.0
    %341 = vmatpush1.msra.mxu0 %v323
    %342 = vmatprep.subr.mxu0 0.0
    %343 = vmatpush1.msra.mxu0 %v324
    %344 = vmatprep.subr.mxu0 0.0
    %345 = vmatpush1.msra.mxu0 %v325
    %346 = vmatprep.subr.mxu0 0.0
    %347 = vmatpush1.msra.mxu0 %v326
    %348 = vmatprep.subr.mxu0 0.0
    %349 = vmatpush1.msra.mxu0 0.0
    %350 = vmatprep.subr.mxu0 0.0
    %351 = vmatpush1.msra.mxu0 0.0
    %352 = vmatprep.subr.mxu0 0.0
    %353 = vmatpush1.msra.mxu0 0.0
    %354 = vmatprep.subr.mxu0 0.0
    %355 = vmatpush1.msra.mxu0 0.0
    %356 = vmatprep.subr.mxu0 0.0
    %357 = vmatpush1.msra.mxu0 0.0
    %358 = vmatprep.subr.mxu0 0.0
    %359 = vmatpush1.msra.mxu0 0.0
    %360 = vmatprep.subr.mxu0 0.0
    %361 = vmatpush1.msra.mxu0 0.0
    %362 = vmatprep.subr.mxu0 0.0
    %363 = vmatpush1.msra.mxu0 0.0
    %364 = vmatprep.subr.mxu0 0.0
    %365 = vmatpush1.msra.mxu0 0.0
    %366 = vmatprep.subr.mxu0 0.0
    %367 = vmatpush1.msra.mxu0 0.0
    %368 = vmatprep.subr.mxu0 0.0
    %369 = vmatpush1.msra.mxu0 0.0
    %370 = vmatprep.subr.mxu0 0.0
    %371 = vmatpush1.msra.mxu0 0.0
    %372 = vmatprep.subr.mxu0 0.0
    %373 = vmatpush1.msra.mxu0 0.0
    %374 = vmatprep.subr.mxu0 0.0
    %375 = vmatpush1.msra.mxu0 0.0
    %376 = vmatprep.subr.mxu0 0.0
    %377 = vmatpush1.msra.mxu0 0.0
    %378 = vmatprep.subr.mxu0 0.0
    %379 = vmatpush1.msra.mxu0 0.0
    %380 = vmatprep.subr.mxu0 0.0
    %381 = vmatpush1.msra.mxu0 0.0
    %382 = vmatprep.subr.mxu0 0.0
    %383 = vmatpush1.msra.mxu0 0.0
    %384 = vmatprep.subr.mxu0 0.0
    %385 = vmatpush1.msra.mxu0 0.0
    %386 = vmatprep.subr.mxu0 0.0
    %387 = vmatpush1.msra.mxu0 0.0
    %388 = vmatprep.subr.mxu0 0.0
    %389 = vmatpush1.msra.mxu0 0.0
    %390 = vmatprep.subr.mxu0 0.0
    %391 = vmatpush1.msra.mxu0 0.0
    %392 = vmatprep.subr.mxu0 0.0
    %393 = vmatpush1.msra.mxu0 0.0
    %394 = vmatprep.subr.mxu0 0.0
    %395 = vmatpush1.msra.mxu0 0.0
    %396 = vmatprep.subr.mxu0 0.0
    %397 = vmatpush1.msra.mxu0 0.0
    %398 = vmatprep.subr.mxu0 0.0
    %399 = vmatpush1.msra.mxu0 0.0
    %400 = vmatprep.subr.mxu0 0.0
    %401 = vmatpush1.msra.mxu0 0.0
    %402 = vmatprep.subr.mxu0 0.0
    %403 = vmatpush1.msra.mxu0 0.0
    %404 = vmatprep.mubr.f32.mxu0 0.0
    %405 = vmatmul.mubr.f32.gmra.mrb[0].mxu0 %v335
    %v406 = vpop.f32.mrb[0].mxu0
    %v407 = vadd.f32 %v332, %v406
    %v408 = vpop.f32.mrb[0].mxu0
    %409 = vmatprep.mubr.f32.mxu0 0.0
    %410 = vmatmul.mubr.f32.gmra.mrb[0].mxu0 %v338
    %v411 = vpop.f32.mrb[0].mxu0
    %v412 = vadd.f32 %v332, %v411
    %v413 = vpop.f32.mrb[0].mxu0
    %414 = vdwg.mxu0
    %vm415 = vcmask 64512
    %v417 = vsel %vm415, %v219, 0
    %v420 = vsel %vm415, %v313, 0
    %422 = vmatprep.subr.mxu0 0.0
    %423 = vmatpush1.xpose.msra.mxu0 %v420
    %424 = vmatprep.subr.mxu0 0.0
    %425 = vmatpush1.xpose.msra.mxu0 0.0
    %426 = vmatprep.subr.mxu0 0.0
    %427 = vmatpush1.xpose.msra.mxu0 0.0
    %428 = vmatprep.subr.mxu0 0.0
    %429 = vmatpush1.xpose.msra.mxu0 0.0
    %430 = vmatprep.subr.mxu0 0.0
    %431 = vmatpush1.xpose.msra.mxu0 0.0
    %432 = vmatprep.subr.mxu0 0.0
    %433 = vmatpush1.xpose.msra.mxu0 0.0
    %434 = vmatprep.subr.mxu0 0.0
    %435 = vmatpush1.xpose.msra.mxu0 0.0
    %436 = vmatprep.subr.mxu0 0.0
    %437 = vmatpush1.xpose.msra.mxu0 0.0
    %438 = vmatprep.subr.mxu0 0.0
    %439 = vmatpush1.xpose.msra.mxu0 0.0
    %440 = vmatprep.subr.mxu0 0.0
    %441 = vmatpush1.xpose.msra.mxu0 0.0
    %442 = vmatprep.subr.mxu0 0.0
    %443 = vmatpush1.xpose.msra.mxu0 0.0
    %444 = vmatprep.subr.mxu0 0.0
    %445 = vmatpush1.xpose.msra.mxu0 0.0
    %446 = vmatprep.subr.mxu0 0.0
    %447 = vmatpush1.xpose.msra.mxu0 0.0
    %448 = vmatprep.subr.mxu0 0.0
    %449 = vmatpush1.xpose.msra.mxu0 0.0
    %450 = vmatprep.subr.mxu0 0.0
    %451 = vmatpush1.xpose.msra.mxu0 0.0
    %452 = vmatprep.subr.mxu0 0.0
    %453 = vmatpush1.xpose.msra.mxu0 0.0
    %454 = vmatprep.subr.mxu0 0.0
    %455 = vmatpush1.xpose.msra.mxu0 0.0
    %456 = vmatprep.subr.mxu0 0.0
    %457 = vmatpush1.xpose.msra.mxu0 0.0
    %458 = vmatprep.subr.mxu0 0.0
    %459 = vmatpush1.xpose.msra.mxu0 0.0
    %460 = vmatprep.subr.mxu0 0.0
    %461 = vmatpush1.xpose.msra.mxu0 0.0
    %462 = vmatprep.subr.mxu0 0.0
    %463 = vmatpush1.xpose.msra.mxu0 0.0
    %464 = vmatprep.subr.mxu0 0.0
    %465 = vmatpush1.xpose.msra.mxu0 0.0
    %466 = vmatprep.subr.mxu0 0.0
    %467 = vmatpush1.xpose.msra.mxu0 0.0
    %468 = vmatprep.subr.mxu0 0.0
    %469 = vmatpush1.xpose.msra.mxu0 0.0
    %470 = vmatprep.subr.mxu0 0.0
    %471 = vmatpush1.xpose.msra.mxu0 0.0
    %472 = vmatprep.subr.mxu0 0.0
    %473 = vmatpush1.xpose.msra.mxu0 0.0
    %474 = vmatprep.subr.mxu0 0.0
    %475 = vmatpush1.xpose.msra.mxu0 0.0
    %476 = vmatprep.subr.mxu0 0.0
    %477 = vmatpush1.xpose.msra.mxu0 0.0
    %478 = vmatprep.subr.mxu0 0.0
    %479 = vmatpush1.xpose.msra.mxu0 0.0
    %480 = vmatprep.subr.mxu0 0.0
    %481 = vmatpush1.xpose.msra.mxu0 0.0
    %482 = vmatprep.subr.mxu0 0.0
    %483 = vmatpush1.xpose.msra.mxu0 0.0
    %484 = vmatprep.subr.mxu0 0.0
    %485 = vmatpush1.xpose.msra.mxu0 0.0
    %486 = vmatprep.mubr.f32.mxu0 0.0
    %487 = vmatmul.mubr.f32.gmra.mrb[0].mxu0 %v417
    %v488 = vpop.f32.mrb[0].mxu0
    %v489 = vadd.f32 0.0, %v488
    %v490 = vpop.f32.mrb[0].mxu0
    %491 = vdwg.mxu0
    %v492 = vmul.f32 %v489, 0.35355338
    %v493 = vsel %vm415, %v492, -inf
    %494 = vmax.xlane.f32.xlu0 %v493
    %v495 = vpop.xlane.xlu0 %494
    %v496 = vsub.f32 %v492, %v495
    %v497 = vmul.f32 %v496, 1.442695
    %v498 = vpow.pop %v497
    %v499 = vsel %vm415, %v498, 0.0
    %500 = vadd.xlane.f32.xlu0 %v499
    %v501 = vpop.xlane.xlu0 %500
    %v502 = vrcp.pop %v501
    %v503 = vmul.f32 %v501, %v502
    %v504 = vsub.f32 2.0, %v503
    %v505 = vmul.f32 %v502, %v504
    %v506 = vmul.f32 %v498, %v505
    %508 = vrot.lane.b32.xlu0 %v506, 64
    %v509 = vpop.permute.xlu0 %508
    %vm511 = vcmask 589312
    %512 = vst.msk [vmem:[#allocation14] sm:$0xff] %vm511, %v509
    %v513 = vsel %vm415, %v506, 0
    %515 = vmatprep.subr.mxu0 0.0
    %516 = vmatpush1.msra.mxu0 %v407
    %517 = vmatprep.subr.mxu0 0.0
    %518 = vmatpush1.msra.mxu0 0.0
    %519 = vmatprep.subr.mxu0 0.0
    %520 = vmatpush1.msra.mxu0 0.0
    %521 = vmatprep.subr.mxu0 0.0
    %522 = vmatpush1.msra.mxu0 0.0
    %523 = vmatprep.subr.mxu0 0.0
    %524 = vmatpush1.msra.mxu0 0.0
    %525 = vmatprep.subr.mxu0 0.0
    %526 = vmatpush1.msra.mxu0 0.0
    %527 = vmatprep.subr.mxu0 0.0
    %528 = vmatpush1.msra.mxu0 0.0
    %529 = vmatprep.subr.mxu0 0.0
    %530 = vmatpush1.msra.mxu0 0.0
    %531 = vmatprep.subr.mxu0 0.0
    %532 = vmatpush1.msra.mxu0 0.0
    %533 = vmatprep.subr.mxu0 0.0
    %534 = vmatpush1.msra.mxu0 0.0
    %535 = vmatprep.subr.mxu0 0.0
    %536 = vmatpush1.msra.mxu0 0.0
    %537 = vmatprep.subr.mxu0 0.0
    %538 = vmatpush1.msra.mxu0 0.0
    %539 = vmatprep.subr.mxu0 0.0
    %540 = vmatpush1.msra.mxu0 0.0
    %541 = vmatprep.subr.mxu0 0.0
    %542 = vmatpush1.msra.mxu0 0.0
    %543 = vmatprep.subr.mxu0 0.0
    %544 = vmatpush1.msra.mxu0 0.0
    %545 = vmatprep.subr.mxu0 0.0
    %546 = vmatpush1.msra.mxu0 0.0
    %547 = vmatprep.subr.mxu0 0.0
    %548 = vmatpush1.msra.mxu0 0.0
    %549 = vmatprep.subr.mxu0 0.0
    %550 = vmatpush1.msra.mxu0 0.0
    %551 = vmatprep.subr.mxu0 0.0
    %552 = vmatpush1.msra.mxu0 0.0
    %553 = vmatprep.subr.mxu0 0.0
    %554 = vmatpush1.msra.mxu0 0.0
    %555 = vmatprep.subr.mxu0 0.0
    %556 = vmatpush1.msra.mxu0 0.0
    %557 = vmatprep.subr.mxu0 0.0
    %558 = vmatpush1.msra.mxu0 0.0
    %559 = vmatprep.subr.mxu0 0.0
    %560 = vmatpush1.msra.mxu0 0.0
    %561 = vmatprep.subr.mxu0 0.0
    %562 = vmatpush1.msra.mxu0 0.0
    %563 = vmatprep.subr.mxu0 0.0
    %564 = vmatpush1.msra.mxu0 0.0
    %565 = vmatprep.subr.mxu0 0.0
    %566 = vmatpush1.msra.mxu0 0.0
    %567 = vmatprep.subr.mxu0 0.0
    %568 = vmatpush1.msra.mxu0 0.0
    %569 = vmatprep.subr.mxu0 0.0
    %570 = vmatpush1.msra.mxu0 0.0
    %571 = vmatprep.subr.mxu0 0.0
    %572 = vmatpush1.msra.mxu0 0.0
    %573 = vmatprep.subr.mxu0 0.0
    %574 = vmatpush1.msra.mxu0 0.0
    %575 = vmatprep.subr.mxu0 0.0
    %576 = vmatpush1.msra.mxu0 0.0
    %577 = vmatprep.subr.mxu0 0.0
    %578 = vmatpush1.msra.mxu0 0.0
    %579 = vmatprep.mubr.f32.mxu0 0.0
    %580 = vmatmul.mubr.f32.gmra.mrb[0].mxu0 %v513
    %v581 = vpop.f32.mrb[0].mxu0
    %v582 = vadd.f32 0.0, %v581
    %v583 = vpop.f32.mrb[0].mxu0
    %584 = vdwg.mxu0
    %585 = vrot.lane.b32.xlu0 %v219, 120
    %v586 = vpop.permute.xlu0 %585
    %587 = vrot.lane.b32.xlu0 %v313, 120
    %v588 = vpop.permute.xlu0 %587
    %v589 = vsel %vm415, %v586, 0
    %v591 = vsel %vm415, %v588, 0
    %593 = vmatprep.subr.mxu0 0.0
    %594 = vmatpush1.xpose.msra.mxu0 %v591
    %595 = vmatprep.subr.mxu0 0.0
    %596 = vmatpush1.xpose.msra.mxu0 0.0
    %597 = vmatprep.subr.mxu0 0.0
    %598 = vmatpush1.xpose.msra.mxu0 0.0
    %599 = vmatprep.subr.mxu0 0.0
    %600 = vmatpush1.xpose.msra.mxu0 0.0
    %601 = vmatprep.subr.mxu0 0.0
    %602 = vmatpush1.xpose.msra.mxu0 0.0
    %603 = vmatprep.subr.mxu0 0.0
    %604 = vmatpush1.xpose.msra.mxu0 0.0
    %605 = vmatprep.subr.mxu0 0.0
    %606 = vmatpush1.xpose.msra.mxu0 0.0
    %607 = vmatprep.subr.mxu0 0.0
    %608 = vmatpush1.xpose.msra.mxu0 0.0
    %609 = vmatprep.subr.mxu0 0.0
    %610 = vmatpush1.xpose.msra.mxu0 0.0
    %611 = vmatprep.subr.mxu0 0.0
    %612 = vmatpush1.xpose.msra.mxu0 0.0
    %613 = vmatprep.subr.mxu0 0.0
    %614 = vmatpush1.xpose.msra.mxu0 0.0
    %615 = vmatprep.subr.mxu0 0.0
    %616 = vmatpush1.xpose.msra.mxu0 0.0
    %617 = vmatprep.subr.mxu0 0.0
    %618 = vmatpush1.xpose.msra.mxu0 0.0
    %619 = vmatprep.subr.mxu0 0.0
    %620 = vmatpush1.xpose.msra.mxu0 0.0
    %621 = vmatprep.subr.mxu0 0.0
    %622 = vmatpush1.xpose.msra.mxu0 0.0
    %623 = vmatprep.subr.mxu0 0.0
    %624 = vmatpush1.xpose.msra.mxu0 0.0
    %625 = vmatprep.subr.mxu0 0.0
    %626 = vmatpush1.xpose.msra.mxu0 0.0
    %627 = vmatprep.subr.mxu0 0.0
    %628 = vmatpush1.xpose.msra.mxu0 0.0
    %629 = vmatprep.subr.mxu0 0.0
    %630 = vmatpush1.xpose.msra.mxu0 0.0
    %631 = vmatprep.subr.mxu0 0.0
    %632 = vmatpush1.xpose.msra.mxu0 0.0
    %633 = vmatprep.subr.mxu0 0.0
    %634 = vmatpush1.xpose.msra.mxu0 0.0
    %635 = vmatprep.subr.mxu0 0.0
    %636 = vmatpush1.xpose.msra.mxu0 0.0
    %637 = vmatprep.subr.mxu0 0.0
    %638 = vmatpush1.xpose.msra.mxu0 0.0
    %639 = vmatprep.subr.mxu0 0.0
    %640 = vmatpush1.xpose.msra.mxu0 0.0
    %641 = vmatprep.subr.mxu0 0.0
    %642 = vmatpush1.xpose.msra.mxu0 0.0
    %643 = vmatprep.subr.mxu0 0.0
    %644 = vmatpush1.xpose.msra.mxu0 0.0
    %645 = vmatprep.subr.mxu0 0.0
    %646 = vmatpush1.xpose.msra.mxu0 0.0
    %647 = vmatprep.subr.mxu0 0.0
    %648 = vmatpush1.xpose.msra.mxu0 0.0
    %649 = vmatprep.subr.mxu0 0.0
    %650 = vmatpush1.xpose.msra.mxu0 0.0
    %651 = vmatprep.subr.mxu0 0.0
    %652 = vmatpush1.xpose.msra.mxu0 0.0
    %653 = vmatprep.subr.mxu0 0.0
    %654 = vmatpush1.xpose.msra.mxu0 0.0
    %655 = vmatprep.subr.mxu0 0.0
    %656 = vmatpush1.xpose.msra.mxu0 0.0
    %657 = vmatprep.mubr.f32.mxu0 0.0
    %658 = vmatmul.mubr.f32.gmra.mrb[0].mxu0 %v589
    %v659 = vpop.f32.mrb[0].mxu0
    %v660 = vadd.f32 0.0, %v659
    %v661 = vpop.f32.mrb[0].mxu0
    %662 = vdwg.mxu0
    %v663 = vmul.f32 %v660, 0.35355338
    %v664 = vsel %vm415, %v663, -inf
    %665 = vmax.xlane.f32.xlu0 %v664
    %v666 = vpop.xlane.xlu0 %665
    %v667 = vsub.f32 %v663, %v666
    %v668 = vmul.f32 %v667, 1.442695
    %v669 = vpow.pop %v668
    %v670 = vsel %vm415, %v669, 0.0
    %671 = vadd.xlane.f32.xlu0 %v670
    %v672 = vpop.xlane.xlu0 %671
    %v673 = vrcp.pop %v672
    %v674 = vmul.f32 %v672, %v673
    %v675 = vsub.f32 2.0, %v674
    %v676 = vmul.f32 %v673, %v675
    %v677 = vmul.f32 %v669, %v676
    %679 = vrot.lane.b32.xlu0 %v677, 72
    %v680 = vpop.permute.xlu0 %679
    %vm682 = vcmask 654912
    %683 = vst.msk [vmem:[#allocation14] sm:$0xff] %vm682, %v680
    %685 = vrot.lane.b32.xlu0 %v407, 120
    %v686 = vpop.permute.xlu0 %685
    %v688 = vsel %vm415, %v677, 0
    %690 = vmatprep.subr.mxu0 0.0
    %691 = vmatpush1.msra.mxu0 %v686
    %692 = vmatprep.subr.mxu0 0.0
    %693 = vmatpush1.msra.mxu0 0.0
    %694 = vmatprep.subr.mxu0 0.0
    %695 = vmatpush1.msra.mxu0 0.0
    %696 = vmatprep.subr.mxu0 0.0
    %697 = vmatpush1.msra.mxu0 0.0
    %698 = vmatprep.subr.mxu0 0.0
    %699 = vmatpush1.msra.mxu0 0.0
    %700 = vmatprep.subr.mxu0 0.0
    %701 = vmatpush1.msra.mxu0 0.0
    %702 = vmatprep.subr.mxu0 0.0
    %703 = vmatpush1.msra.mxu0 0.0
    %704 = vmatprep.subr.mxu0 0.0
    %705 = vmatpush1.msra.mxu0 0.0
    %706 = vmatprep.subr.mxu0 0.0
    %707 = vmatpush1.msra.mxu0 0.0
    %708 = vmatprep.subr.mxu0 0.0
    %709 = vmatpush1.msra.mxu0 0.0
    %710 = vmatprep.subr.mxu0 0.0
    %711 = vmatpush1.msra.mxu0 0.0
    %712 = vmatprep.subr.mxu0 0.0
    %713 = vmatpush1.msra.mxu0 0.0
    %714 = vmatprep.subr.mxu0 0.0
    %715 = vmatpush1.msra.mxu0 0.0
    %716 = vmatprep.subr.mxu0 0.0
    %717 = vmatpush1.msra.mxu0 0.0
    %718 = vmatprep.subr.mxu0 0.0
    %719 = vmatpush1.msra.mxu0 0.0
    %720 = vmatprep.subr.mxu0 0.0
    %721 = vmatpush1.msra.mxu0 0.0
    %722 = vmatprep.subr.mxu0 0.0
    %723 = vmatpush1.msra.mxu0 0.0
    %724 = vmatprep.subr.mxu0 0.0
    %725 = vmatpush1.msra.mxu0 0.0
    %726 = vmatprep.subr.mxu0 0.0
    %727 = vmatpush1.msra.mxu0 0.0
    %728 = vmatprep.subr.mxu0 0.0
    %729 = vmatpush1.msra.mxu0 0.0
    %730 = vmatprep.subr.mxu0 0.0
    %731 = vmatpush1.msra.mxu0 0.0
    %732 = vmatprep.subr.mxu0 0.0
    %733 = vmatpush1.msra.mxu0 0.0
    %734 = vmatprep.subr.mxu0 0.0
    %735 = vmatpush1.msra.mxu0 0.0
    %736 = vmatprep.subr.mxu0 0.0
    %737 = vmatpush1.msra.mxu0 0.0
    %738 = vmatprep.subr.mxu0 0.0
    %739 = vmatpush1.msra.mxu0 0.0
    %740 = vmatprep.subr.mxu0 0.0
    %741 = vmatpush1.msra.mxu0 0.0
    %742 = vmatprep.subr.mxu0 0.0
    %743 = vmatpush1.msra.mxu0 0.0
    %744 = vmatprep.subr.mxu0 0.0
    %745 = vmatpush1.msra.mxu0 0.0
    %746 = vmatprep.subr.mxu0 0.0
    %747 = vmatpush1.msra.mxu0 0.0
    %748 = vmatprep.subr.mxu0 0.0
    %749 = vmatpush1.msra.mxu0 0.0
    %750 = vmatprep.subr.mxu0 0.0
    %751 = vmatpush1.msra.mxu0 0.0
    %752 = vmatprep.subr.mxu0 0.0
    %753 = vmatpush1.msra.mxu0 0.0
    %754 = vmatprep.mubr.f32.mxu0 0.0
    %755 = vmatmul.mubr.f32.gmra.mrb[0].mxu0 %v688
    %v756 = vpop.f32.mrb[0].mxu0
    %v757 = vadd.f32 0.0, %v756
    %v758 = vpop.f32.mrb[0].mxu0
    %759 = vdwg.mxu0
    %760 = vrot.lane.b32.xlu0 %v219, 112
    %v761 = vpop.permute.xlu0 %760
    %762 = vrot.lane.b32.xlu0 %v313, 112
    %v763 = vpop.permute.xlu0 %762
    %v764 = vsel %vm415, %v761, 0
    %v766 = vsel %vm415, %v763, 0
    %768 = vmatprep.subr.mxu0 0.0
    %769 = vmatpush1.xpose.msra.mxu0 %v766
    %770 = vmatprep.subr.mxu0 0.0
    %771 = vmatpush1.xpose.msra.mxu0 0.0
    %772 = vmatprep.subr.mxu0 0.0
    %773 = vmatpush1.xpose.msra.mxu0 0.0
    %774 = vmatprep.subr.mxu0 0.0
    %775 = vmatpush1.xpose.msra.mxu0 0.0
    %776 = vmatprep.subr.mxu0 0.0
    %777 = vmatpush1.xpose.msra.mxu0 0.0
    %778 = vmatprep.subr.mxu0 0.0
    %779 = vmatpush1.xpose.msra.mxu0 0.0
    %780 = vmatprep.subr.mxu0 0.0
    %781 = vmatpush1.xpose.msra.mxu0 0.0
    %782 = vmatprep.subr.mxu0 0.0
    %783 = vmatpush1.xpose.msra.mxu0 0.0
    %784 = vmatprep.subr.mxu0 0.0
    %785 = vmatpush1.xpose.msra.mxu0 0.0
    %786 = vmatprep.subr.mxu0 0.0
    %787 = vmatpush1.xpose.msra.mxu0 0.0
    %788 = vmatprep.subr.mxu0 0.0
    %789 = vmatpush1.xpose.msra.mxu0 0.0
    %790 = vmatprep.subr.mxu0 0.0
    %791 = vmatpush1.xpose.msra.mxu0 0.0
    %792 = vmatprep.subr.mxu0 0.0
    %793 = vmatpush1.xpose.msra.mxu0 0.0
    %794 = vmatprep.subr.mxu0 0.0
    %795 = vmatpush1.xpose.msra.mxu0 0.0
    %796 = vmatprep.subr.mxu0 0.0
    %797 = vmatpush1.xpose.msra.mxu0 0.0
    %798 = vmatprep.subr.mxu0 0.0
    %799 = vmatpush1.xpose.msra.mxu0 0.0
    %800 = vmatprep.subr.mxu0 0.0
    %801 = vmatpush1.xpose.msra.mxu0 0.0
    %802 = vmatprep.subr.mxu0 0.0
    %803 = vmatpush1.xpose.msra.mxu0 0.0
    %804 = vmatprep.subr.mxu0 0.0
    %805 = vmatpush1.xpose.msra.mxu0 0.0
    %806 = vmatprep.subr.mxu0 0.0
    %807 = vmatpush1.xpose.msra.mxu0 0.0
    %808 = vmatprep.subr.mxu0 0.0
    %809 = vmatpush1.xpose.msra.mxu0 0.0
    %810 = vmatprep.subr.mxu0 0.0
    %811 = vmatpush1.xpose.msra.mxu0 0.0
    %812 = vmatprep.subr.mxu0 0.0
    %813 = vmatpush1.xpose.msra.mxu0 0.0
    %814 = vmatprep.subr.mxu0 0.0
    %815 = vmatpush1.xpose.msra.mxu0 0.0
    %816 = vmatprep.subr.mxu0 0.0
    %817 = vmatpush1.xpose.msra.mxu0 0.0
    %818 = vmatprep.subr.mxu0 0.0
    %819 = vmatpush1.xpose.msra.mxu0 0.0
    %820 = vmatprep.subr.mxu0 0.0
    %821 = vmatpush1.xpose.msra.mxu0 0.0
    %822 = vmatprep.subr.mxu0 0.0
    %823 = vmatpush1.xpose.msra.mxu0 0.0
    %824 = vmatprep.subr.mxu0 0.0
    %825 = vmatpush1.xpose.msra.mxu0 0.0
    %826 = vmatprep.subr.mxu0 0.0
    %827 = vmatpush1.xpose.msra.mxu0 0.0
    %828 = vmatprep.subr.mxu0 0.0
    %829 = vmatpush1.xpose.msra.mxu0 0.0
    %830 = vmatprep.subr.mxu0 0.0
    %831 = vmatpush1.xpose.msra.mxu0 0.0
    %832 = vmatprep.mubr.f32.mxu0 0.0
    %833 = vmatmul.mubr.f32.gmra.mrb[0].mxu0 %v764
    %v834 = vpop.f32.mrb[0].mxu0
    %v835 = vadd.f32 0.0, %v834
    %v836 = vpop.f32.mrb[0].mxu0
    %837 = vdwg.mxu0
    %v838 = vmul.f32 %v835, 0.35355338
    %v839 = vsel %vm415, %v838, -inf
    %840 = vmax.xlane.f32.xlu0 %v839
    %v841 = vpop.xlane.xlu0 %840
    %v842 = vsub.f32 %v838, %v841
    %v843 = vmul.f32 %v842, 1.442695
    %v844 = vpow.pop %v843
    %v845 = vsel %vm415, %v844, 0.0
    %846 = vadd.xlane.f32.xlu0 %v845
    %v847 = vpop.xlane.xlu0 %846
    %v848 = vrcp.pop %v847
    %v849 = vmul.f32 %v847, %v848
    %v850 = vsub.f32 2.0, %v849
    %v851 = vmul.f32 %v848, %v850
    %v852 = vmul.f32 %v844, %v851
    %854 = vrot.lane.b32.xlu0 %v852, 80
    %v855 = vpop.permute.xlu0 %854
    %vm857 = vcmask 720512
    %858 = vst.msk [vmem:[#allocation14] sm:$0xff] %vm857, %v855
    %859 = vrot.lane.b32.xlu0 %v407, 112
    %v860 = vpop.permute.xlu0 %859
    %v862 = vsel %vm415, %v852, 0
    %864 = vmatprep.subr.mxu0 0.0
    %865 = vmatpush1.msra.mxu0 %v860
    %866 = vmatprep.subr.mxu0 0.0
    %867 = vmatpush1.msra.mxu0 0.0
    %868 = vmatprep.subr.mxu0 0.0
    %869 = vmatpush1.msra.mxu0 0.0
    %870 = vmatprep.subr.mxu0 0.0
    %871 = vmatpush1.msra.mxu0 0.0
    %872 = vmatprep.subr.mxu0 0.0
    %873 = vmatpush1.msra.mxu0 0.0
    %874 = vmatprep.subr.mxu0 0.0
    %875 = vmatpush1.msra.mxu0 0.0
    %876 = vmatprep.subr.mxu0 0.0
    %877 = vmatpush1.msra.mxu0 0.0
    %878 = vmatprep.subr.mxu0 0.0
    %879 = vmatpush1.msra.mxu0 0.0
    %880 = vmatprep.subr.mxu0 0.0
    %881 = vmatpush1.msra.mxu0 0.0
    %882 = vmatprep.subr.mxu0 0.0
    %883 = vmatpush1.msra.mxu0 0.0
    %884 = vmatprep.subr.mxu0 0.0
    %885 = vmatpush1.msra.mxu0 0.0
    %886 = vmatprep.subr.mxu0 0.0
    %887 = vmatpush1.msra.mxu0 0.0
    %888 = vmatprep.subr.mxu0 0.0
    %889 = vmatpush1.msra.mxu0 0.0
    %890 = vmatprep.subr.mxu0 0.0
    %891 = vmatpush1.msra.mxu0 0.0
    %892 = vmatprep.subr.mxu0 0.0
    %893 = vmatpush1.msra.mxu0 0.0
    %894 = vmatprep.subr.mxu0 0.0
    %895 = vmatpush1.msra.mxu0 0.0
    %896 = vmatprep.subr.mxu0 0.0
    %897 = vmatpush1.msra.mxu0 0.0
    %898 = vmatprep.subr.mxu0 0.0
    %899 = vmatpush1.msra.mxu0 0.0
    %900 = vmatprep.subr.mxu0 0.0
    %901 = vmatpush1.msra.mxu0 0.0
    %902 = vmatprep.subr.mxu0 0.0
    %903 = vmatpush1.msra.mxu0 0.0
    %904 = vmatprep.subr.mxu0 0.0
    %905 = vmatpush1.msra.mxu0 0.0
    %906 = vmatprep.subr.mxu0 0.0
    %907 = vmatpush1.msra.mxu0 0.0
    %908 = vmatprep.subr.mxu0 0.0
    %909 = vmatpush1.msra.mxu0 0.0
    %910 = vmatprep.subr.mxu0 0.0
    %911 = vmatpush1.msra.mxu0 0.0
    %912 = vmatprep.subr.mxu0 0.0
    %913 = vmatpush1.msra.mxu0 0.0
    %914 = vmatprep.subr.mxu0 0.0
    %915 = vmatpush1.msra.mxu0 0.0
    %916 = vmatprep.subr.mxu0 0.0
    %917 = vmatpush1.msra.mxu0 0.0
    %918 = vmatprep.subr.mxu0 0.0
    %919 = vmatpush1.msra.mxu0 0.0
    %920 = vmatprep.subr.mxu0 0.0
    %921 = vmatpush1.msra.mxu0 0.0
    %922 = vmatprep.subr.mxu0 0.0
    %923 = vmatpush1.msra.mxu0 0.0
    %924 = vmatprep.subr.mxu0 0.0
    %925 = vmatpush1.msra.mxu0 0.0
    %926 = vmatprep.subr.mxu0 0.0
    %927 = vmatpush1.msra.mxu0 0.0
    %928 = vmatprep.mubr.f32.mxu0 0.0
    %929 = vmatmul.mubr.f32.gmra.mrb[0].mxu0 %v862
    %v930 = vpop.f32.mrb[0].mxu0
    %v931 = vadd.f32 0.0, %v930
    %v932 = vpop.f32.mrb[0].mxu0
    %933 = vdwg.mxu0
    %934 = vrot.lane.b32.xlu0 %v219, 104
    %v935 = vpop.permute.xlu0 %934
    %936 = vrot.lane.b32.xlu0 %v313, 104
    %v937 = vpop.permute.xlu0 %936
    %v938 = vsel %vm415, %v935, 0
    %v940 = vsel %vm415, %v937, 0
    %942 = vmatprep.subr.mxu0 0.0
    %943 = vmatpush1.xpose.msra.mxu0 %v940
    %944 = vmatprep.subr.mxu0 0.0
    %945 = vmatpush1.xpose.msra.mxu0 0.0
    %946 = vmatprep.subr.mxu0 0.0
    %947 = vmatpush1.xpose.msra.mxu0 0.0
    %948 = vmatprep.subr.mxu0 0.0
    %949 = vmatpush1.xpose.msra.mxu0 0.0
    %950 = vmatprep.subr.mxu0 0.0
    %951 = vmatpush1.xpose.msra.mxu0 0.0
    %952 = vmatprep.subr.mxu0 0.0
    %953 = vmatpush1.xpose.msra.mxu0 0.0
    %954 = vmatprep.subr.mxu0 0.0
    %955 = vmatpush1.xpose.msra.mxu0 0.0
    %956 = vmatprep.subr.mxu0 0.0
    %957 = vmatpush1.xpose.msra.mxu0 0.0
    %958 = vmatprep.subr.mxu0 0.0
    %959 = vmatpush1.xpose.msra.mxu0 0.0
    %960 = vmatprep.subr.mxu0 0.0
    %961 = vmatpush1.xpose.msra.mxu0 0.0
    %962 = vmatprep.subr.mxu0 0.0
    %963 = vmatpush1.xpose.msra.mxu0 0.0
    %964 = vmatprep.subr.mxu0 0.0
    %965 = vmatpush1.xpose.msra.mxu0 0.0
    %966 = vmatprep.subr.mxu0 0.0
    %967 = vmatpush1.xpose.msra.mxu0 0.0
    %968 = vmatprep.subr.mxu0 0.0
    %969 = vmatpush1.xpose.msra.mxu0 0.0
    %970 = vmatprep.subr.mxu0 0.0
    %971 = vmatpush1.xpose.msra.mxu0 0.0
    %972 = vmatprep.subr.mxu0 0.0
    %973 = vmatpush1.xpose.msra.mxu0 0.0
    %974 = vmatprep.subr.mxu0 0.0
    %975 = vmatpush1.xpose.msra.mxu0 0.0
    %976 = vmatprep.subr.mxu0 0.0
    %977 = vmatpush1.xpose.msra.mxu0 0.0
    %978 = vmatprep.subr.mxu0 0.0
    %979 = vmatpush1.xpose.msra.mxu0 0.0
    %980 = vmatprep.subr.mxu0 0.0
    %981 = vmatpush1.xpose.msra.mxu0 0.0
    %982 = vmatprep.subr.mxu0 0.0
    %983 = vmatpush1.xpose.msra.mxu0 0.0
    %984 = vmatprep.subr.mxu0 0.0
    %985 = vmatpush1.xpose.msra.mxu0 0.0
    %986 = vmatprep.subr.mxu0 0.0
    %987 = vmatpush1.xpose.msra.mxu0 0.0
    %988 = vmatprep.subr.mxu0 0.0
    %989 = vmatpush1.xpose.msra.mxu0 0.0
    %990 = vmatprep.subr.mxu0 0.0
    %991 = vmatpush1.xpose.msra.mxu0 0.0
    %992 = vmatprep.subr.mxu0 0.0
    %993 = vmatpush1.xpose.msra.mxu0 0.0
    %994 = vmatprep.subr.mxu0 0.0
    %995 = vmatpush1.xpose.msra.mxu0 0.0
    %996 = vmatprep.subr.mxu0 0.0
    %997 = vmatpush1.xpose.msra.mxu0 0.0
    %998 = vmatprep.subr.mxu0 0.0
    %999 = vmatpush1.xpose.msra.mxu0 0.0
    %1000 = vmatprep.subr.mxu0 0.0
    %1001 = vmatpush1.xpose.msra.mxu0 0.0
    %1002 = vmatprep.subr.mxu0 0.0
    %1003 = vmatpush1.xpose.msra.mxu0 0.0
    %1004 = vmatprep.subr.mxu0 0.0
    %1005 = vmatpush1.xpose.msra.mxu0 0.0
    %1006 = vmatprep.mubr.f32.mxu0 0.0
    %1007 = vmatmul.mubr.f32.gmra.mrb[0].mxu0 %v938
    %v1008 = vpop.f32.mrb[0].mxu0
    %v1009 = vadd.f32 0.0, %v1008
    %v1010 = vpop.f32.mrb[0].mxu0
    %1011 = vdwg.mxu0
    %v1012 = vmul.f32 %v1009, 0.35355338
    %v1013 = vsel %vm415, %v1012, -inf
    %1014 = vmax.xlane.f32.xlu0 %v1013
    %v1015 = vpop.xlane.xlu0 %1014
    %v1016 = vsub.f32 %v1012, %v1015
    %v1017 = vmul.f32 %v1016, 1.442695
    %v1018 = vpow.pop %v1017
    %v1019 = vsel %vm415, %v1018, 0.0
    %1020 = vadd.xlane.f32.xlu0 %v1019
    %v1021 = vpop.xlane.xlu0 %1020
    %v1022 = vrcp.pop %v1021
    %v1023 = vmul.f32 %v1021, %v1022
    %v1024 = vsub.f32 2.0, %v1023
    %v1025 = vmul.f32 %v1022, %v1024
    %v1026 = vmul.f32 %v1018, %v1025
    %1028 = vrot.lane.b32.xlu0 %v1026, 88
    %v1029 = vpop.permute.xlu0 %1028
    %vm1031 = vcmask 786112
    %1032 = vst.msk [vmem:[#allocation14] sm:$0xff] %vm1031, %v1029
    %1033 = vrot.lane.b32.xlu0 %v407, 104
    %v1034 = vpop.permute.xlu0 %1033
    %v1036 = vsel %vm415, %v1026, 0
    %1038 = vmatprep.subr.mxu0 0.0
    %1039 = vmatpush1.msra.mxu0 %v1034
    %1040 = vmatprep.subr.mxu0 0.0
    %1041 = vmatpush1.msra.mxu0 0.0
    %1042 = vmatprep.subr.mxu0 0.0
    %1043 = vmatpush1.msra.mxu0 0.0
    %1044 = vmatprep.subr.mxu0 0.0
    %1045 = vmatpush1.msra.mxu0 0.0
    %1046 = vmatprep.subr.mxu0 0.0
    %1047 = vmatpush1.msra.mxu0 0.0
    %1048 = vmatprep.subr.mxu0 0.0
    %1049 = vmatpush1.msra.mxu0 0.0
    %1050 = vmatprep.subr.mxu0 0.0
    %1051 = vmatpush1.msra.mxu0 0.0
    %1052 = vmatprep.subr.mxu0 0.0
    %1053 = vmatpush1.msra.mxu0 0.0
    %1054 = vmatprep.subr.mxu0 0.0
    %1055 = vmatpush1.msra.mxu0 0.0
    %1056 = vmatprep.subr.mxu0 0.0
    %1057 = vmatpush1.msra.mxu0 0.0
    %1058 = vmatprep.subr.mxu0 0.0
    %1059 = vmatpush1.msra.mxu0 0.0
    %1060 = vmatprep.subr.mxu0 0.0
    %1061 = vmatpush1.msra.mxu0 0.0
    %1062 = vmatprep.subr.mxu0 0.0
    %1063 = vmatpush1.msra.mxu0 0.0
    %1064 = vmatprep.subr.mxu0 0.0
    %1065 = vmatpush1.msra.mxu0 0.0
    %1066 = vmatprep.subr.mxu0 0.0
    %1067 = vmatpush1.msra.mxu0 0.0
    %1068 = vmatprep.subr.mxu0 0.0
    %1069 = vmatpush1.msra.mxu0 0.0
    %1070 = vmatprep.subr.mxu0 0.0
    %1071 = vmatpush1.msra.mxu0 0.0
    %1072 = vmatprep.subr.mxu0 0.0
    %1073 = vmatpush1.msra.mxu0 0.0
    %1074 = vmatprep.subr.mxu0 0.0
    %1075 = vmatpush1.msra.mxu0 0.0
    %1076 = vmatprep.subr.mxu0 0.0
    %1077 = vmatpush1.msra.mxu0 0.0
    %1078 = vmatprep.subr.mxu0 0.0
    %1079 = vmatpush1.msra.mxu0 0.0
    %1080 = vmatprep.subr.mxu0 0.0
    %1081 = vmatpush1.msra.mxu0 0.0
    %1082 = vmatprep.subr.mxu0 0.0
    %1083 = vmatpush1.msra.mxu0 0.0
    %1084 = vmatprep.subr.mxu0 0.0
    %1085 = vmatpush1.msra.mxu0 0.0
    %1086 = vmatprep.subr.mxu0 0.0
    %1087 = vmatpush1.msra.mxu0 0.0
    %1088 = vmatprep.subr.mxu0 0.0
    %1089 = vmatpush1.msra.mxu0 0.0
    %1090 = vmatprep.subr.mxu0 0.0
    %1091 = vmatpush1.msra.mxu0 0.0
    %1092 = vmatprep.subr.mxu0 0.0
    %1093 = vmatpush1.msra.mxu0 0.0
    %1094 = vmatprep.subr.mxu0 0.0
    %1095 = vmatpush1.msra.mxu0 0.0
    %1096 = vmatprep.subr.mxu0 0.0
    %1097 = vmatpush1.msra.mxu0 0.0
    %1098 = vmatprep.subr.mxu0 0.0
    %1099 = vmatpush1.msra.mxu0 0.0
    %1100 = vmatprep.subr.mxu0 0.0
    %1101 = vmatpush1.msra.mxu0 0.0
    %1102 = vmatprep.mubr.f32.mxu0 0.0
    %1103 = vmatmul.mubr.f32.gmra.mrb[0].mxu0 %v1036
    %v1104 = vpop.f32.mrb[0].mxu0
    %v1105 = vadd.f32 0.0, %v1104
    %v1106 = vpop.f32.mrb[0].mxu0
    %1107 = vdwg.mxu0
    %1109 = vrot.lane.b32.xlu0 %v757, 8
    %v1110 = vpop.permute.xlu0 %1109
    %1113 = vrot.lane.b32.xlu0 %v931, 16
    %v1114 = vpop.permute.xlu0 %1113
    %1117 = vrot.lane.b32.xlu0 %v1105, 24
    %v1118 = vpop.permute.xlu0 %1117
    %v1120 = vsel %vm415, %v582, %v1110
    %vm1121 = vcmask 130048
    %v1122 = vsel %vm1121, %v1120, %v1114
    %vm1123 = vcmask 195584
    %v1124 = vsel %vm1123, %v1122, %v1118
    %v1126 = vsel %vm415, %v224, 0
    %v1129 = vsel %vm415, %v318, 0
    %1131 = vmatprep.subr.mxu0 0.0
    %1132 = vmatpush1.xpose.msra.mxu0 %v1129
    %1133 = vmatprep.subr.mxu0 0.0
    %1134 = vmatpush1.xpose.msra.mxu0 0.0
    %1135 = vmatprep.subr.mxu0 0.0
    %1136 = vmatpush1.xpose.msra.mxu0 0.0
    %1137 = vmatprep.subr.mxu0 0.0
    %1138 = vmatpush1.xpose.msra.mxu0 0.0
    %1139 = vmatprep.subr.mxu0 0.0
    %1140 = vmatpush1.xpose.msra.mxu0 0.0
    %1141 = vmatprep.subr.mxu0 0.0
    %1142 = vmatpush1.xpose.msra.mxu0 0.0
    %1143 = vmatprep.subr.mxu0 0.0
    %1144 = vmatpush1.xpose.msra.mxu0 0.0
    %1145 = vmatprep.subr.mxu0 0.0
    %1146 = vmatpush1.xpose.msra.mxu0 0.0
    %1147 = vmatprep.subr.mxu0 0.0
    %1148 = vmatpush1.xpose.msra.mxu0 0.0
    %1149 = vmatprep.subr.mxu0 0.0
    %1150 = vmatpush1.xpose.msra.mxu0 0.0
    %1151 = vmatprep.subr.mxu0 0.0
    %1152 = vmatpush1.xpose.msra.mxu0 0.0
    %1153 = vmatprep.subr.mxu0 0.0
    %1154 = vmatpush1.xpose.msra.mxu0 0.0
    %1155 = vmatprep.subr.mxu0 0.0
    %1156 = vmatpush1.xpose.msra.mxu0 0.0
    %1157 = vmatprep.subr.mxu0 0.0
    %1158 = vmatpush1.xpose.msra.mxu0 0.0
    %1159 = vmatprep.subr.mxu0 0.0
    %1160 = vmatpush1.xpose.msra.mxu0 0.0
    %1161 = vmatprep.subr.mxu0 0.0
    %1162 = vmatpush1.xpose.msra.mxu0 0.0
    %1163 = vmatprep.subr.mxu0 0.0
    %1164 = vmatpush1.xpose.msra.mxu0 0.0
    %1165 = vmatprep.subr.mxu0 0.0
    %1166 = vmatpush1.xpose.msra.mxu0 0.0
    %1167 = vmatprep.subr.mxu0 0.0
    %1168 = vmatpush1.xpose.msra.mxu0 0.0
    %1169 = vmatprep.subr.mxu0 0.0
    %1170 = vmatpush1.xpose.msra.mxu0 0.0
    %1171 = vmatprep.subr.mxu0 0.0
    %1172 = vmatpush1.xpose.msra.mxu0 0.0
    %1173 = vmatprep.subr.mxu0 0.0
    %1174 = vmatpush1.xpose.msra.mxu0 0.0
    %1175 = vmatprep.subr.mxu0 0.0
    %1176 = vmatpush1.xpose.msra.mxu0 0.0
    %1177 = vmatprep.subr.mxu0 0.0
    %1178 = vmatpush1.xpose.msra.mxu0 0.0
    %1179 = vmatprep.subr.mxu0 0.0
    %1180 = vmatpush1.xpose.msra.mxu0 0.0
    %1181 = vmatprep.subr.mxu0 0.0
    %1182 = vmatpush1.xpose.msra.mxu0 0.0
    %1183 = vmatprep.subr.mxu0 0.0
    %1184 = vmatpush1.xpose.msra.mxu0 0.0
    %1185 = vmatprep.subr.mxu0 0.0
    %1186 = vmatpush1.xpose.msra.mxu0 0.0
    %1187 = vmatprep.subr.mxu0 0.0
    %1188 = vmatpush1.xpose.msra.mxu0 0.0
    %1189 = vmatprep.subr.mxu0 0.0
    %1190 = vmatpush1.xpose.msra.mxu0 0.0
    %1191 = vmatprep.subr.mxu0 0.0
    %1192 = vmatpush1.xpose.msra.mxu0 0.0
    %1193 = vmatprep.subr.mxu0 0.0
    %1194 = vmatpush1.xpose.msra.mxu0 0.0
    %1195 = vmatprep.mubr.f32.mxu0 0.0
    %1196 = vmatmul.mubr.f32.gmra.mrb[0].mxu0 %v1126
    %v1197 = vpop.f32.mrb[0].mxu0
    %v1198 = vadd.f32 0.0, %v1197
    %v1199 = vpop.f32.mrb[0].mxu0
    %1200 = vdwg.mxu0
    %v1201 = vmul.f32 %v1198, 0.35355338
    %v1202 = vsel %vm415, %v1201, -inf
    %1203 = vmax.xlane.f32.xlu0 %v1202
    %v1204 = vpop.xlane.xlu0 %1203
    %v1205 = vsub.f32 %v1201, %v1204
    %v1206 = vmul.f32 %v1205, 1.442695
    %v1207 = vpow.pop %v1206
    %v1208 = vsel %vm415, %v1207, 0.0
    %1209 = vadd.xlane.f32.xlu0 %v1208
    %v1210 = vpop.xlane.xlu0 %1209
    %v1211 = vrcp.pop %v1210
    %v1212 = vmul.f32 %v1210, %v1211
    %v1213 = vsub.f32 2.0, %v1212
    %v1214 = vmul.f32 %v1211, %v1213
    %v1215 = vmul.f32 %v1207, %v1214
    %1217 = vrot.lane.b32.xlu0 %v1215, 96
    %v1218 = vpop.permute.xlu0 %1217
    %vm1220 = vcmask 851712
    %1221 = vst.msk [vmem:[#allocation14] sm:$0xff] %vm1220, %v1218
    %v1222 = vsel %vm415, %v1215, 0
    %1224 = vmatprep.subr.mxu0 0.0
    %1225 = vmatpush1.msra.mxu0 %v412
    %1226 = vmatprep.subr.mxu0 0.0
    %1227 = vmatpush1.msra.mxu0 0.0
    %1228 = vmatprep.subr.mxu0 0.0
    %1229 = vmatpush1.msra.mxu0 0.0
    %1230 = vmatprep.subr.mxu0 0.0
    %1231 = vmatpush1.msra.mxu0 0.0
    %1232 = vmatprep.subr.mxu0 0.0
    %1233 = vmatpush1.msra.mxu0 0.0
    %1234 = vmatprep.subr.mxu0 0.0
    %1235 = vmatpush1.msra.mxu0 0.0
    %1236 = vmatprep.subr.mxu0 0.0
    %1237 = vmatpush1.msra.mxu0 0.0
    %1238 = vmatprep.subr.mxu0 0.0
    %1239 = vmatpush1.msra.mxu0 0.0
    %1240 = vmatprep.subr.mxu0 0.0
    %1241 = vmatpush1.msra.mxu0 0.0
    %1242 = vmatprep.subr.mxu0 0.0
    %1243 = vmatpush1.msra.mxu0 0.0
    %1244 = vmatprep.subr.mxu0 0.0
    %1245 = vmatpush1.msra.mxu0 0.0
    %1246 = vmatprep.subr.mxu0 0.0
    %1247 = vmatpush1.msra.mxu0 0.0
    %1248 = vmatprep.subr.mxu0 0.0
    %1249 = vmatpush1.msra.mxu0 0.0
    %1250 = vmatprep.subr.mxu0 0.0
    %1251 = vmatpush1.msra.mxu0 0.0
    %1252 = vmatprep.subr.mxu0 0.0
    %1253 = vmatpush1.msra.mxu0 0.0
    %1254 = vmatprep.subr.mxu0 0.0
    %1255 = vmatpush1.msra.mxu0 0.0
    %1256 = vmatprep.subr.mxu0 0.0
    %1257 = vmatpush1.msra.mxu0 0.0
    %1258 = vmatprep.subr.mxu0 0.0
    %1259 = vmatpush1.msra.mxu0 0.0
    %1260 = vmatprep.subr.mxu0 0.0
    %1261 = vmatpush1.msra.mxu0 0.0
    %1262 = vmatprep.subr.mxu0 0.0
    %1263 = vmatpush1.msra.mxu0 0.0
    %1264 = vmatprep.subr.mxu0 0.0
    %1265 = vmatpush1.msra.mxu0 0.0
    %1266 = vmatprep.subr.mxu0 0.0
    %1267 = vmatpush1.msra.mxu0 0.0
    %1268 = vmatprep.subr.mxu0 0.0
    %1269 = vmatpush1.msra.mxu0 0.0
    %1270 = vmatprep.subr.mxu0 0.0
    %1271 = vmatpush1.msra.mxu0 0.0
    %1272 = vmatprep.subr.mxu0 0.0
    %1273 = vmatpush1.msra.mxu0 0.0
    %1274 = vmatprep.subr.mxu0 0.0
    %1275 = vmatpush1.msra.mxu0 0.0
    %1276 = vmatprep.subr.mxu0 0.0
    %1277 = vmatpush1.msra.mxu0 0.0
    %1278 = vmatprep.subr.mxu0 0.0
    %1279 = vmatpush1.msra.mxu0 0.0
    %1280 = vmatprep.subr.mxu0 0.0
    %1281 = vmatpush1.msra.mxu0 0.0
    %1282 = vmatprep.subr.mxu0 0.0
    %1283 = vmatpush1.msra.mxu0 0.0
    %1284 = vmatprep.subr.mxu0 0.0
    %1285 = vmatpush1.msra.mxu0 0.0
    %1286 = vmatprep.subr.mxu0 0.0
    %1287 = vmatpush1.msra.mxu0 0.0
    %1288 = vmatprep.mubr.f32.mxu0 0.0
    %1289 = vmatmul.mubr.f32.gmra.mrb[0].mxu0 %v1222
    %v1290 = vpop.f32.mrb[0].mxu0
    %v1291 = vadd.f32 0.0, %v1290
    %v1292 = vpop.f32.mrb[0].mxu0
    %1293 = vdwg.mxu0
    %1294 = vrot.lane.b32.xlu0 %v224, 120
    %v1295 = vpop.permute.xlu0 %1294
    %1296 = vrot.lane.b32.xlu0 %v318, 120
    %v1297 = vpop.permute.xlu0 %1296
    %v1298 = vsel %vm415, %v1295, 0
    %v1300 = vsel %vm415, %v1297, 0
    %1302 = vmatprep.subr.mxu0 0.0
    %1303 = vmatpush1.xpose.msra.mxu0 %v1300
    %1304 = vmatprep.subr.mxu0 0.0
    %1305 = vmatpush1.xpose.msra.mxu0 0.0
    %1306 = vmatprep.subr.mxu0 0.0
    %1307 = vmatpush1.xpose.msra.mxu0 0.0
    %1308 = vmatprep.subr.mxu0 0.0
    %1309 = vmatpush1.xpose.msra.mxu0 0.0
    %1310 = vmatprep.subr.mxu0 0.0
    %1311 = vmatpush1.xpose.msra.mxu0 0.0
    %1312 = vmatprep.subr.mxu0 0.0
    %1313 = vmatpush1.xpose.msra.mxu0 0.0
    %1314 = vmatprep.subr.mxu0 0.0
    %1315 = vmatpush1.xpose.msra.mxu0 0.0
    %1316 = vmatprep.subr.mxu0 0.0
    %1317 = vmatpush1.xpose.msra.mxu0 0.0
    %1318 = vmatprep.subr.mxu0 0.0
    %1319 = vmatpush1.xpose.msra.mxu0 0.0
    %1320 = vmatprep.subr.mxu0 0.0
    %1321 = vmatpush1.xpose.msra.mxu0 0.0
    %1322 = vmatprep.subr.mxu0 0.0
    %1323 = vmatpush1.xpose.msra.mxu0 0.0
    %1324 = vmatprep.subr.mxu0 0.0
    %1325 = vmatpush1.xpose.msra.mxu0 0.0
    %1326 = vmatprep.subr.mxu0 0.0
    %1327 = vmatpush1.xpose.msra.mxu0 0.0
    %1328 = vmatprep.subr.mxu0 0.0
    %1329 = vmatpush1.xpose.msra.mxu0 0.0
    %1330 = vmatprep.subr.mxu0 0.0
    %1331 = vmatpush1.xpose.msra.mxu0 0.0
    %1332 = vmatprep.subr.mxu0 0.0
    %1333 = vmatpush1.xpose.msra.mxu0 0.0
    %1334 = vmatprep.subr.mxu0 0.0
    %1335 = vmatpush1.xpose.msra.mxu0 0.0
    %1336 = vmatprep.subr.mxu0 0.0
    %1337 = vmatpush1.xpose.msra.mxu0 0.0
    %1338 = vmatprep.subr.mxu0 0.0
    %1339 = vmatpush1.xpose.msra.mxu0 0.0
    %1340 = vmatprep.subr.mxu0 0.0
    %1341 = vmatpush1.xpose.msra.mxu0 0.0
    %1342 = vmatprep.subr.mxu0 0.0
    %1343 = vmatpush1.xpose.msra.mxu0 0.0
    %1344 = vmatprep.subr.mxu0 0.0
    %1345 = vmatpush1.xpose.msra.mxu0 0.0
    %1346 = vmatprep.subr.mxu0 0.0
    %1347 = vmatpush1.xpose.msra.mxu0 0.0
    %1348 = vmatprep.subr.mxu0 0.0
    %1349 = vmatpush1.xpose.msra.mxu0 0.0
    %1350 = vmatprep.subr.mxu0 0.0
    %1351 = vmatpush1.xpose.msra.mxu0 0.0
    %1352 = vmatprep.subr.mxu0 0.0
    %1353 = vmatpush1.xpose.msra.mxu0 0.0
    %1354 = vmatprep.subr.mxu0 0.0
    %1355 = vmatpush1.xpose.msra.mxu0 0.0
    %1356 = vmatprep.subr.mxu0 0.0
    %1357 = vmatpush1.xpose.msra.mxu0 0.0
    %1358 = vmatprep.subr.mxu0 0.0
    %1359 = vmatpush1.xpose.msra.mxu0 0.0
    %1360 = vmatprep.subr.mxu0 0.0
    %1361 = vmatpush1.xpose.msra.mxu0 0.0
    %1362 = vmatprep.subr.mxu0 0.0
    %1363 = vmatpush1.xpose.msra.mxu0 0.0
    %1364 = vmatprep.subr.mxu0 0.0
    %1365 = vmatpush1.xpose.msra.mxu0 0.0
    %1366 = vmatprep.mubr.f32.mxu0 0.0
    %1367 = vmatmul.mubr.f32.gmra.mrb[0].mxu0 %v1298
    %v1368 = vpop.f32.mrb[0].mxu0
    %v1369 = vadd.f32 0.0, %v1368
    %v1370 = vpop.f32.mrb[0].mxu0
    %1371 = vdwg.mxu0
    %v1372 = vmul.f32 %v1369, 0.35355338
    %v1373 = vsel %vm415, %v1372, -inf
    %1374 = vmax.xlane.f32.xlu0 %v1373
    %v1375 = vpop.xlane.xlu0 %1374
    %v1376 = vsub.f32 %v1372, %v1375
    %v1377 = vmul.f32 %v1376, 1.442695
    %v1378 = vpow.pop %v1377
    %v1379 = vsel %vm415, %v1378, 0.0
    %1380 = vadd.xlane.f32.xlu0 %v1379
    %v1381 = vpop.xlane.xlu0 %1380
    %v1382 = vrcp.pop %v1381
    %v1383 = vmul.f32 %v1381, %v1382
    %v1384 = vsub.f32 2.0, %v1383
    %v1385 = vmul.f32 %v1382, %v1384
    %v1386 = vmul.f32 %v1378, %v1385
    %1388 = vrot.lane.b32.xlu0 %v1386, 104
    %v1389 = vpop.permute.xlu0 %1388
    %vm1391 = vcmask 917312
    %1392 = vst.msk [vmem:[#allocation14] sm:$0xff] %vm1391, %v1389
    %1394 = vrot.lane.b32.xlu0 %v412, 120
    %v1395 = vpop.permute.xlu0 %1394
    %v1397 = vsel %vm415, %v1386, 0
    %1399 = vmatprep.subr.mxu0 0.0
    %1400 = vmatpush1.msra.mxu0 %v1395
    %1401 = vmatprep.subr.mxu0 0.0
    %1402 = vmatpush1.msra.mxu0 0.0
    %1403 = vmatprep.subr.mxu0 0.0
    %1404 = vmatpush1.msra.mxu0 0.0
    %1405 = vmatprep.subr.mxu0 0.0
    %1406 = vmatpush1.msra.mxu0 0.0
    %1407 = vmatprep.subr.mxu0 0.0
    %1408 = vmatpush1.msra.mxu0 0.0
    %1409 = vmatprep.subr.mxu0 0.0
    %1410 = vmatpush1.msra.mxu0 0.0
    %1411 = vmatprep.subr.mxu0 0.0
    %1412 = vmatpush1.msra.mxu0 0.0
    %1413 = vmatprep.subr.mxu0 0.0
    %1414 = vmatpush1.msra.mxu0 0.0
    %1415 = vmatprep.subr.mxu0 0.0
    %1416 = vmatpush1.msra.mxu0 0.0
    %1417 = vmatprep.subr.mxu0 0.0
    %1418 = vmatpush1.msra.mxu0 0.0
    %1419 = vmatprep.subr.mxu0 0.0
    %1420 = vmatpush1.msra.mxu0 0.0
    %1421 = vmatprep.subr.mxu0 0.0
    %1422 = vmatpush1.msra.mxu0 0.0
    %1423 = vmatprep.subr.mxu0 0.0
    %1424 = vmatpush1.msra.mxu0 0.0
    %1425 = vmatprep.subr.mxu0 0.0
    %1426 = vmatpush1.msra.mxu0 0.0
    %1427 = vmatprep.subr.mxu0 0.0
    %1428 = vmatpush1.msra.mxu0 0.0
    %1429 = vmatprep.subr.mxu0 0.0
    %1430 = vmatpush1.msra.mxu0 0.0
    %1431 = vmatprep.subr.mxu0 0.0
    %1432 = vmatpush1.msra.mxu0 0.0
    %1433 = vmatprep.subr.mxu0 0.0
    %1434 = vmatpush1.msra.mxu0 0.0
    %1435 = vmatprep.subr.mxu0 0.0
    %1436 = vmatpush1.msra.mxu0 0.0
    %1437 = vmatprep.subr.mxu0 0.0
    %1438 = vmatpush1.msra.mxu0 0.0
    %1439 = vmatprep.subr.mxu0 0.0
    %1440 = vmatpush1.msra.mxu0 0.0
    %1441 = vmatprep.subr.mxu0 0.0
    %1442 = vmatpush1.msra.mxu0 0.0
    %1443 = vmatprep.subr.mxu0 0.0
    %1444 = vmatpush1.msra.mxu0 0.0
    %1445 = vmatprep.subr.mxu0 0.0
    %1446 = vmatpush1.msra.mxu0 0.0
    %1447 = vmatprep.subr.mxu0 0.0
    %1448 = vmatpush1.msra.mxu0 0.0
    %1449 = vmatprep.subr.mxu0 0.0
    %1450 = vmatpush1.msra.mxu0 0.0
    %1451 = vmatprep.subr.mxu0 0.0
    %1452 = vmatpush1.msra.mxu0 0.0
    %1453 = vmatprep.subr.mxu0 0.0
    %1454 = vmatpush1.msra.mxu0 0.0
    %1455 = vmatprep.subr.mxu0 0.0
    %1456 = vmatpush1.msra.mxu0 0.0
    %1457 = vmatprep.subr.mxu0 0.0
    %1458 = vmatpush1.msra.mxu0 0.0
    %1459 = vmatprep.subr.mxu0 0.0
    %1460 = vmatpush1.msra.mxu0 0.0
    %1461 = vmatprep.subr.mxu0 0.0
    %1462 = vmatpush1.msra.mxu0 0.0
    %1463 = vmatprep.mubr.f32.mxu0 0.0
    %1464 = vmatmul.mubr.f32.gmra.mrb[0].mxu0 %v1397
    %v1465 = vpop.f32.mrb[0].mxu0
    %v1466 = vadd.f32 0.0, %v1465
    %v1467 = vpop.f32.mrb[0].mxu0
    %1468 = vdwg.mxu0
    %1469 = vrot.lane.b32.xlu0 %v224, 112
    %v1470 = vpop.permute.xlu0 %1469
    %1471 = vrot.lane.b32.xlu0 %v318, 112
    %v1472 = vpop.permute.xlu0 %1471
    %v1473 = vsel %vm415, %v1470, 0
    %v1475 = vsel %vm415, %v1472, 0
    %1477 = vmatprep.subr.mxu0 0.0
    %1478 = vmatpush1.xpose.msra.mxu0 %v1475
    %1479 = vmatprep.subr.mxu0 0.0
    %1480 = vmatpush1.xpose.msra.mxu0 0.0
    %1481 = vmatprep.subr.mxu0 0.0
    %1482 = vmatpush1.xpose.msra.mxu0 0.0
    %1483 = vmatprep.subr.mxu0 0.0
    %1484 = vmatpush1.xpose.msra.mxu0 0.0
    %1485 = vmatprep.subr.mxu0 0.0
    %1486 = vmatpush1.xpose.msra.mxu0 0.0
    %1487 = vmatprep.subr.mxu0 0.0
    %1488 = vmatpush1.xpose.msra.mxu0 0.0
    %1489 = vmatprep.subr.mxu0 0.0
    %1490 = vmatpush1.xpose.msra.mxu0 0.0
    %1491 = vmatprep.subr.mxu0 0.0
    %1492 = vmatpush1.xpose.msra.mxu0 0.0
    %1493 = vmatprep.subr.mxu0 0.0
    %1494 = vmatpush1.xpose.msra.mxu0 0.0
    %1495 = vmatprep.subr.mxu0 0.0
    %1496 = vmatpush1.xpose.msra.mxu0 0.0
    %1497 = vmatprep.subr.mxu0 0.0
    %1498 = vmatpush1.xpose.msra.mxu0 0.0
    %1499 = vmatprep.subr.mxu0 0.0
    %1500 = vmatpush1.xpose.msra.mxu0 0.0
    %1501 = vmatprep.subr.mxu0 0.0
    %1502 = vmatpush1.xpose.msra.mxu0 0.0
    %1503 = vmatprep.subr.mxu0 0.0
    %1504 = vmatpush1.xpose.msra.mxu0 0.0
    %1505 = vmatprep.subr.mxu0 0.0
    %1506 = vmatpush1.xpose.msra.mxu0 0.0
    %1507 = vmatprep.subr.mxu0 0.0
    %1508 = vmatpush1.xpose.msra.mxu0 0.0
    %1509 = vmatprep.subr.mxu0 0.0
    %1510 = vmatpush1.xpose.msra.mxu0 0.0
    %1511 = vmatprep.subr.mxu0 0.0
    %1512 = vmatpush1.xpose.msra.mxu0 0.0
    %1513 = vmatprep.subr.mxu0 0.0
    %1514 = vmatpush1.xpose.msra.mxu0 0.0
    %1515 = vmatprep.subr.mxu0 0.0
    %1516 = vmatpush1.xpose.msra.mxu0 0.0
    %1517 = vmatprep.subr.mxu0 0.0
    %1518 = vmatpush1.xpose.msra.mxu0 0.0
    %1519 = vmatprep.subr.mxu0 0.0
    %1520 = vmatpush1.xpose.msra.mxu0 0.0
    %1521 = vmatprep.subr.mxu0 0.0
    %1522 = vmatpush1.xpose.msra.mxu0 0.0
    %1523 = vmatprep.subr.mxu0 0.0
    %1524 = vmatpush1.xpose.msra.mxu0 0.0
    %1525 = vmatprep.subr.mxu0 0.0
    %1526 = vmatpush1.xpose.msra.mxu0 0.0
    %1527 = vmatprep.subr.mxu0 0.0
    %1528 = vmatpush1.xpose.msra.mxu0 0.0
    %1529 = vmatprep.subr.mxu0 0.0
    %1530 = vmatpush1.xpose.msra.mxu0 0.0
    %1531 = vmatprep.subr.mxu0 0.0
    %1532 = vmatpush1.xpose.msra.mxu0 0.0
    %1533 = vmatprep.subr.mxu0 0.0
    %1534 = vmatpush1.xpose.msra.mxu0 0.0
    %1535 = vmatprep.subr.mxu0 0.0
    %1536 = vmatpush1.xpose.msra.mxu0 0.0
    %1537 = vmatprep.subr.mxu0 0.0
    %1538 = vmatpush1.xpose.msra.mxu0 0.0
    %1539 = vmatprep.subr.mxu0 0.0
    %1540 = vmatpush1.xpose.msra.mxu0 0.0
    %1541 = vmatprep.mubr.f32.mxu0 0.0
    %1542 = vmatmul.mubr.f32.gmra.mrb[0].mxu0 %v1473
    %v1543 = vpop.f32.mrb[0].mxu0
    %v1544 = vadd.f32 0.0, %v1543
    %v1545 = vpop.f32.mrb[0].mxu0
    %1546 = vdwg.mxu0
    %v1547 = vmul.f32 %v1544, 0.35355338
    %v1548 = vsel %vm415, %v1547, -inf
    %1549 = vmax.xlane.f32.xlu0 %v1548
    %v1550 = vpop.xlane.xlu0 %1549
    %v1551 = vsub.f32 %v1547, %v1550
    %v1552 = vmul.f32 %v1551, 1.442695
    %v1553 = vpow.pop %v1552
    %v1554 = vsel %vm415, %v1553, 0.0
    %1555 = vadd.xlane.f32.xlu0 %v1554
    %v1556 = vpop.xlane.xlu0 %1555
    %v1557 = vrcp.pop %v1556
    %v1558 = vmul.f32 %v1556, %v1557
    %v1559 = vsub.f32 2.0, %v1558
    %v1560 = vmul.f32 %v1557, %v1559
    %v1561 = vmul.f32 %v1553, %v1560
    %1563 = vrot.lane.b32.xlu0 %v1561, 112
    %v1564 = vpop.permute.xlu0 %1563
    %vm1566 = vcmask 982912
    %1567 = vst.msk [vmem:[#allocation14] sm:$0xff] %vm1566, %v1564
    %1568 = vrot.lane.b32.xlu0 %v412, 112
    %v1569 = vpop.permute.xlu0 %1568
    %v1571 = vsel %vm415, %v1561, 0
    %1573 = vmatprep.subr.mxu0 0.0
    %1574 = vmatpush1.msra.mxu0 %v1569
    %1575 = vmatprep.subr.mxu0 0.0
    %1576 = vmatpush1.msra.mxu0 0.0
    %1577 = vmatprep.subr.mxu0 0.0
    %1578 = vmatpush1.msra.mxu0 0.0
    %1579 = vmatprep.subr.mxu0 0.0
    %1580 = vmatpush1.msra.mxu0 0.0
    %1581 = vmatprep.subr.mxu0 0.0
    %1582 = vmatpush1.msra.mxu0 0.0
    %1583 = vmatprep.subr.mxu0 0.0
    %1584 = vmatpush1.msra.mxu0 0.0
    %1585 = vmatprep.subr.mxu0 0.0
    %1586 = vmatpush1.msra.mxu0 0.0
    %1587 = vmatprep.subr.mxu0 0.0
    %1588 = vmatpush1.msra.mxu0 0.0
    %1589 = vmatprep.subr.mxu0 0.0
    %1590 = vmatpush1.msra.mxu0 0.0
    %1591 = vmatprep.subr.mxu0 0.0
    %1592 = vmatpush1.msra.mxu0 0.0
    %1593 = vmatprep.subr.mxu0 0.0
    %1594 = vmatpush1.msra.mxu0 0.0
    %1595 = vmatprep.subr.mxu0 0.0
    %1596 = vmatpush1.msra.mxu0 0.0
    %1597 = vmatprep.subr.mxu0 0.0
    %1598 = vmatpush1.msra.mxu0 0.0
    %1599 = vmatprep.subr.mxu0 0.0
    %1600 = vmatpush1.msra.mxu0 0.0
    %1601 = vmatprep.subr.mxu0 0.0
    %1602 = vmatpush1.msra.mxu0 0.0
    %1603 = vmatprep.subr.mxu0 0.0
    %1604 = vmatpush1.msra.mxu0 0.0
    %1605 = vmatprep.subr.mxu0 0.0
    %1606 = vmatpush1.msra.mxu0 0.0
    %1607 = vmatprep.subr.mxu0 0.0
    %1608 = vmatpush1.msra.mxu0 0.0
    %1609 = vmatprep.subr.mxu0 0.0
    %1610 = vmatpush1.msra.mxu0 0.0
    %1611 = vmatprep.subr.mxu0 0.0
    %1612 = vmatpush1.msra.mxu0 0.0
    %1613 = vmatprep.subr.mxu0 0.0
    %1614 = vmatpush1.msra.mxu0 0.0
    %1615 = vmatprep.subr.mxu0 0.0
    %1616 = vmatpush1.msra.mxu0 0.0
    %1617 = vmatprep.subr.mxu0 0.0
    %1618 = vmatpush1.msra.mxu0 0.0
    %1619 = vmatprep.subr.mxu0 0.0
    %1620 = vmatpush1.msra.mxu0 0.0
    %1621 = vmatprep.subr.mxu0 0.0
    %1622 = vmatpush1.msra.mxu0 0.0
    %1623 = vmatprep.subr.mxu0 0.0
    %1624 = vmatpush1.msra.mxu0 0.0
    %1625 = vmatprep.subr.mxu0 0.0
    %1626 = vmatpush1.msra.mxu0 0.0
    %1627 = vmatprep.subr.mxu0 0.0
    %1628 = vmatpush1.msra.mxu0 0.0
    %1629 = vmatprep.subr.mxu0 0.0
    %1630 = vmatpush1.msra.mxu0 0.0
    %1631 = vmatprep.subr.mxu0 0.0
    %1632 = vmatpush1.msra.mxu0 0.0
    %1633 = vmatprep.subr.mxu0 0.0
    %1634 = vmatpush1.msra.mxu0 0.0
    %1635 = vmatprep.subr.mxu0 0.0
    %1636 = vmatpush1.msra.mxu0 0.0
    %1637 = vmatprep.mubr.f32.mxu0 0.0
    %1638 = vmatmul.mubr.f32.gmra.mrb[0].mxu0 %v1571
    %v1639 = vpop.f32.mrb[0].mxu0
    %v1640 = vadd.f32 0.0, %v1639
    %v1641 = vpop.f32.mrb[0].mxu0
    %1642 = vdwg.mxu0
    %1643 = vrot.lane.b32.xlu0 %v224, 104
    %v1644 = vpop.permute.xlu0 %1643
    %1645 = vrot.lane.b32.xlu0 %v318, 104
    %v1646 = vpop.permute.xlu0 %1645
    %v1647 = vsel %vm415, %v1644, 0
    %v1649 = vsel %vm415, %v1646, 0
    %1651 = vmatprep.subr.mxu0 0.0
    %1652 = vmatpush1.xpose.msra.mxu0 %v1649
    %1653 = vmatprep.subr.mxu0 0.0
    %1654 = vmatpush1.xpose.msra.mxu0 0.0
    %1655 = vmatprep.subr.mxu0 0.0
    %1656 = vmatpush1.xpose.msra.mxu0 0.0
    %1657 = vmatprep.subr.mxu0 0.0
    %1658 = vmatpush1.xpose.msra.mxu0 0.0
    %1659 = vmatprep.subr.mxu0 0.0
    %1660 = vmatpush1.xpose.msra.mxu0 0.0
    %1661 = vmatprep.subr.mxu0 0.0
    %1662 = vmatpush1.xpose.msra.mxu0 0.0
    %1663 = vmatprep.subr.mxu0 0.0
    %1664 = vmatpush1.xpose.msra.mxu0 0.0
    %1665 = vmatprep.subr.mxu0 0.0
    %1666 = vmatpush1.xpose.msra.mxu0 0.0
    %1667 = vmatprep.subr.mxu0 0.0
    %1668 = vmatpush1.xpose.msra.mxu0 0.0
    %1669 = vmatprep.subr.mxu0 0.0
    %1670 = vmatpush1.xpose.msra.mxu0 0.0
    %1671 = vmatprep.subr.mxu0 0.0
    %1672 = vmatpush1.xpose.msra.mxu0 0.0
    %1673 = vmatprep.subr.mxu0 0.0
    %1674 = vmatpush1.xpose.msra.mxu0 0.0
    %1675 = vmatprep.subr.mxu0 0.0
    %1676 = vmatpush1.xpose.msra.mxu0 0.0
    %1677 = vmatprep.subr.mxu0 0.0
    %1678 = vmatpush1.xpose.msra.mxu0 0.0
    %1679 = vmatprep.subr.mxu0 0.0
    %1680 = vmatpush1.xpose.msra.mxu0 0.0
    %1681 = vmatprep.subr.mxu0 0.0
    %1682 = vmatpush1.xpose.msra.mxu0 0.0
    %1683 = vmatprep.subr.mxu0 0.0
    %1684 = vmatpush1.xpose.msra.mxu0 0.0
    %1685 = vmatprep.subr.mxu0 0.0
    %1686 = vmatpush1.xpose.msra.mxu0 0.0
    %1687 = vmatprep.subr.mxu0 0.0
    %1688 = vmatpush1.xpose.msra.mxu0 0.0
    %1689 = vmatprep.subr.mxu0 0.0
    %1690 = vmatpush1.xpose.msra.mxu0 0.0
    %1691 = vmatprep.subr.mxu0 0.0
    %1692 = vmatpush1.xpose.msra.mxu0 0.0
    %1693 = vmatprep.subr.mxu0 0.0
    %1694 = vmatpush1.xpose.msra.mxu0 0.0
    %1695 = vmatprep.subr.mxu0 0.0
    %1696 = vmatpush1.xpose.msra.mxu0 0.0
    %1697 = vmatprep.subr.mxu0 0.0
    %1698 = vmatpush1.xpose.msra.mxu0 0.0
    %1699 = vmatprep.subr.mxu0 0.0
    %1700 = vmatpush1.xpose.msra.mxu0 0.0
    %1701 = vmatprep.subr.mxu0 0.0
    %1702 = vmatpush1.xpose.msra.mxu0 0.0
    %1703 = vmatprep.subr.mxu0 0.0
    %1704 = vmatpush1.xpose.msra.mxu0 0.0
    %1705 = vmatprep.subr.mxu0 0.0
    %1706 = vmatpush1.xpose.msra.mxu0 0.0
    %1707 = vmatprep.subr.mxu0 0.0
    %1708 = vmatpush1.xpose.msra.mxu0 0.0
    %1709 = vmatprep.subr.mxu0 0.0
    %1710 = vmatpush1.xpose.msra.mxu0 0.0
    %1711 = vmatprep.subr.mxu0 0.0
    %1712 = vmatpush1.xpose.msra.mxu0 0.0
    %1713 = vmatprep.subr.mxu0 0.0
    %1714 = vmatpush1.xpose.msra.mxu0 0.0
    %1715 = vmatprep.mubr.f32.mxu0 0.0
    %1716 = vmatmul.mubr.f32.gmra.mrb[0].mxu0 %v1647
    %v1717 = vpop.f32.mrb[0].mxu0
    %v1718 = vadd.f32 0.0, %v1717
    %v1719 = vpop.f32.mrb[0].mxu0
    %1720 = vdwg.mxu0
    %v1721 = vmul.f32 %v1718, 0.35355338
    %v1722 = vsel %vm415, %v1721, -inf
    %1723 = vmax.xlane.f32.xlu0 %v1722
    %v1724 = vpop.xlane.xlu0 %1723
    %v1725 = vsub.f32 %v1721, %v1724
    %v1726 = vmul.f32 %v1725, 1.442695
    %v1727 = vpow.pop %v1726
    %v1728 = vsel %vm415, %v1727, 0.0
    %1729 = vadd.xlane.f32.xlu0 %v1728
    %v1730 = vpop.xlane.xlu0 %1729
    %v1731 = vrcp.pop %v1730
    %v1732 = vmul.f32 %v1730, %v1731
    %v1733 = vsub.f32 2.0, %v1732
    %v1734 = vmul.f32 %v1731, %v1733
    %v1735 = vmul.f32 %v1727, %v1734
    %1737 = vrot.lane.b32.xlu0 %v1735, 120
    %v1738 = vpop.permute.xlu0 %1737
    %vm1740 = vcmask 1048512
    %1741 = vst.msk [vmem:[#allocation14] sm:$0xff] %vm1740, %v1738
    %1742 = vrot.lane.b32.xlu0 %v412, 104
    %v1743 = vpop.permute.xlu0 %1742
    %v1745 = vsel %vm415, %v1735, 0
    %1747 = vmatprep.subr.mxu0 0.0
    %1748 = vmatpush1.msra.mxu0 %v1743
    %1749 = vmatprep.subr.mxu0 0.0
    %1750 = vmatpush1.msra.mxu0 0.0
    %1751 = vmatprep.subr.mxu0 0.0
    %1752 = vmatpush1.msra.mxu0 0.0
    %1753 = vmatprep.subr.mxu0 0.0
    %1754 = vmatpush1.msra.mxu0 0.0
    %1755 = vmatprep.subr.mxu0 0.0
    %1756 = vmatpush1.msra.mxu0 0.0
    %1757 = vmatprep.subr.mxu0 0.0
    %1758 = vmatpush1.msra.mxu0 0.0
    %1759 = vmatprep.subr.mxu0 0.0
    %1760 = vmatpush1.msra.mxu0 0.0
    %1761 = vmatprep.subr.mxu0 0.0
    %1762 = vmatpush1.msra.mxu0 0.0
    %1763 = vmatprep.subr.mxu0 0.0
    %1764 = vmatpush1.msra.mxu0 0.0
    %1765 = vmatprep.subr.mxu0 0.0
    %1766 = vmatpush1.msra.mxu0 0.0
    %1767 = vmatprep.subr.mxu0 0.0
    %1768 = vmatpush1.msra.mxu0 0.0
    %1769 = vmatprep.subr.mxu0 0.0
    %1770 = vmatpush1.msra.mxu0 0.0
    %1771 = vmatprep.subr.mxu0 0.0
    %1772 = vmatpush1.msra.mxu0 0.0
    %1773 = vmatprep.subr.mxu0 0.0
    %1774 = vmatpush1.msra.mxu0 0.0
    %1775 = vmatprep.subr.mxu0 0.0
    %1776 = vmatpush1.msra.mxu0 0.0
    %1777 = vmatprep.subr.mxu0 0.0
    %1778 = vmatpush1.msra.mxu0 0.0
    %1779 = vmatprep.subr.mxu0 0.0
    %1780 = vmatpush1.msra.mxu0 0.0
    %1781 = vmatprep.subr.mxu0 0.0
    %1782 = vmatpush1.msra.mxu0 0.0
    %1783 = vmatprep.subr.mxu0 0.0
    %1784 = vmatpush1.msra.mxu0 0.0
    %1785 = vmatprep.subr.mxu0 0.0
    %1786 = vmatpush1.msra.mxu0 0.0
    %1787 = vmatprep.subr.mxu0 0.0
    %1788 = vmatpush1.msra.mxu0 0.0
    %1789 = vmatprep.subr.mxu0 0.0
    %1790 = vmatpush1.msra.mxu0 0.0
    %1791 = vmatprep.subr.mxu0 0.0
    %1792 = vmatpush1.msra.mxu0 0.0
    %1793 = vmatprep.subr.mxu0 0.0
    %1794 = vmatpush1.msra.mxu0 0.0
    %1795 = vmatprep.subr.mxu0 0.0
    %1796 = vmatpush1.msra.mxu0 0.0
    %1797 = vmatprep.subr.mxu0 0.0
    %1798 = vmatpush1.msra.mxu0 0.0
    %1799 = vmatprep.subr.mxu0 0.0
    %1800 = vmatpush1.msra.mxu0 0.0
    %1801 = vmatprep.subr.mxu0 0.0
    %1802 = vmatpush1.msra.mxu0 0.0
    %1803 = vmatprep.subr.mxu0 0.0
    %1804 = vmatpush1.msra.mxu0 0.0
    %1805 = vmatprep.subr.mxu0 0.0
    %1806 = vmatpush1.msra.mxu0 0.0
    %1807 = vmatprep.subr.mxu0 0.0
    %1808 = vmatpush1.msra.mxu0 0.0
    %1809 = vmatprep.subr.mxu0 0.0
    %1810 = vmatpush1.msra.mxu0 0.0
    %1811 = vmatprep.mubr.f32.mxu0 0.0
    %1812 = vmatmul.mubr.f32.gmra.mrb[0].mxu0 %v1745
    %v1813 = vpop.f32.mrb[0].mxu0
    %v1814 = vadd.f32 0.0, %v1813
    %v1815 = vpop.f32.mrb[0].mxu0
    %1816 = vdwg.mxu0
    %1818 = vrot.lane.b32.xlu0 %v1466, 8
    %v1819 = vpop.permute.xlu0 %1818
    %1822 = vrot.lane.b32.xlu0 %v1640, 16
    %v1823 = vpop.permute.xlu0 %1822
    %1826 = vrot.lane.b32.xlu0 %v1814, 24
    %v1827 = vpop.permute.xlu0 %1826
    %v1829 = vsel %vm415, %v1291, %v1819
    %v1830 = vsel %vm1121, %v1829, %v1823
    %v1831 = vsel %vm1123, %v1830, %v1827
    %v1832 = vld [vmem:[%s9] sm:$0xff]
    %v1833 = vld [vmem:[%s9 + $0x8] sm:$0xff]
    %v1834 = vld [vmem:[%s9 + $0x10] sm:$0xff]
    %v1835 = vld [vmem:[%s9 + $0x18] sm:$0xff]
    %v1836 = vld [vmem:[%s10] sm:$0x1]
    %v1838 = vlaneseq
    %v1839 = vshrl.u32 %v1838, 7
    %v1840 = vsub.s32 0, %v1839
    %v1841 = vrot.slane %v1836, %v1840
    %v1844 = vsel %vm145, %v1124, 0
    %v1847 = vsel %vm145, %v1831, 0
    %1849 = vmatprep.subr.mxu0 0.0
    %1850 = vmatpush1.msra.mxu0 %v1832
    %1851 = vmatprep.subr.mxu0 0.0
    %1852 = vmatpush1.msra.mxu0 %v1833
    %1853 = vmatprep.subr.mxu0 0.0
    %1854 = vmatpush1.msra.mxu0 %v1834
    %1855 = vmatprep.subr.mxu0 0.0
    %1856 = vmatpush1.msra.mxu0 %v1835
    %1857 = vmatprep.subr.mxu0 0.0
    %1858 = vmatpush1.msra.mxu0 0.0
    %1859 = vmatprep.subr.mxu0 0.0
    %1860 = vmatpush1.msra.mxu0 0.0
    %1861 = vmatprep.subr.mxu0 0.0
    %1862 = vmatpush1.msra.mxu0 0.0
    %1863 = vmatprep.subr.mxu0 0.0
    %1864 = vmatpush1.msra.mxu0 0.0
    %1865 = vmatprep.subr.mxu0 0.0
    %1866 = vmatpush1.msra.mxu0 0.0
    %1867 = vmatprep.subr.mxu0 0.0
    %1868 = vmatpush1.msra.mxu0 0.0
    %1869 = vmatprep.subr.mxu0 0.0
    %1870 = vmatpush1.msra.mxu0 0.0
    %1871 = vmatprep.subr.mxu0 0.0
    %1872 = vmatpush1.msra.mxu0 0.0
    %1873 = vmatprep.subr.mxu0 0.0
    %1874 = vmatpush1.msra.mxu0 0.0
    %1875 = vmatprep.subr.mxu0 0.0
    %1876 = vmatpush1.msra.mxu0 0.0
    %1877 = vmatprep.subr.mxu0 0.0
    %1878 = vmatpush1.msra.mxu0 0.0
    %1879 = vmatprep.subr.mxu0 0.0
    %1880 = vmatpush1.msra.mxu0 0.0
    %1881 = vmatprep.subr.mxu0 0.0
    %1882 = vmatpush1.msra.mxu0 0.0
    %1883 = vmatprep.subr.mxu0 0.0
    %1884 = vmatpush1.msra.mxu0 0.0
    %1885 = vmatprep.subr.mxu0 0.0
    %1886 = vmatpush1.msra.mxu0 0.0
    %1887 = vmatprep.subr.mxu0 0.0
    %1888 = vmatpush1.msra.mxu0 0.0
    %1889 = vmatprep.subr.mxu0 0.0
    %1890 = vmatpush1.msra.mxu0 0.0
    %1891 = vmatprep.subr.mxu0 0.0
    %1892 = vmatpush1.msra.mxu0 0.0
    %1893 = vmatprep.subr.mxu0 0.0
    %1894 = vmatpush1.msra.mxu0 0.0
    %1895 = vmatprep.subr.mxu0 0.0
    %1896 = vmatpush1.msra.mxu0 0.0
    %1897 = vmatprep.subr.mxu0 0.0
    %1898 = vmatpush1.msra.mxu0 0.0
    %1899 = vmatprep.subr.mxu0 0.0
    %1900 = vmatpush1.msra.mxu0 0.0
    %1901 = vmatprep.subr.mxu0 0.0
    %1902 = vmatpush1.msra.mxu0 0.0
    %1903 = vmatprep.subr.mxu0 0.0
    %1904 = vmatpush1.msra.mxu0 0.0
    %1905 = vmatprep.subr.mxu0 0.0
    %1906 = vmatpush1.msra.mxu0 0.0
    %1907 = vmatprep.subr.mxu0 0.0
    %1908 = vmatpush1.msra.mxu0 0.0
    %1909 = vmatprep.subr.mxu0 0.0
    %1910 = vmatpush1.msra.mxu0 0.0
    %1911 = vmatprep.subr.mxu0 0.0
    %1912 = vmatpush1.msra.mxu0 0.0
    %1913 = vmatprep.mubr.f32.mxu0 0.0
    %1914 = vmatmul.mubr.f32.gmra.mrb[0].mxu0 %v1844
    %v1915 = vpop.f32.mrb[0].mxu0
    %v1916 = vadd.f32 %v1841, %v1915
    %v1917 = vpop.f32.mrb[0].mxu0
    %1918 = vmatprep.mubr.f32.mxu0 0.0
    %1919 = vmatmul.mubr.f32.gmra.mrb[0].mxu0 %v1847
    %v1920 = vpop.f32.mrb[0].mxu0
    %v1921 = vadd.f32 %v1841, %v1920
    %v1922 = vpop.f32.mrb[0].mxu0
    %1923 = vdwg.mxu0
    %1924 = vst.msk [vmem:[#allocation14] sm:$0xff] %vm145, %v1916
    %1926 = vrot.lane.b32.xlu0 %v1921, 32
    %v1927 = vpop.permute.xlu0 %1926
    %vm1929 = vcmask 523520
    %1930 = vst.msk [vmem:[#allocation14] sm:$0xff] %vm1929, %v1927
    // Predicated region
    $region74: #{tpu_custom_call.1} parent=1 // pred_check
      _
    $region75: #{tpu_custom_call.1} parent=1 // pred_check_branch
      %1932 = sbr.rel (0) target = $region77
    $region76: #{tpu_custom_call.1} parent=1 // pred_region
      %s1934 = ssub.s32 128, 128
      %1935 = vsyncadd [#allocation4], %s1934
      %s1937 = sshll.u32 [#allocation14], 4
      %s1938 = int_to_ptr.vmem [resolvable:$true] %s1937
      %1940 = dma.vmem_to_hbm [thread:$0]  %s1938, 128, %s11, [#allocation4]
    $region77: #{tpu_custom_call.1} parent=1 // pred_fallthru
      _
    // Predicated region
    $region78: #{tpu_custom_call.1} parent=1 // pred_check
      _
    $region79: #{tpu_custom_call.1} parent=1 // pred_check_branch
      %1942 = sbr.rel (0) target = $region81
    $region80: #{tpu_custom_call.1} parent=1 // pred_region
      %1943 = dma.done [#allocation4], 128
    $region81: #{tpu_custom_call.1} parent=1 // pred_fallthru
      _
    %1944 = vsyncpa [#allocation3], 1
    %1945 = vsyncpa [#allocation6], 1
    %1946 = vsyncpa [#allocation9], 1
    %1947 = vsyncpa [#allocation12], 1
    %1948 = vsyncpa [#allocation4], 1

</llo_original>
